<compile_context>
chip_gen: v6e
topology: v6e:2x2x1
jax: 0.10.0
libtpu: 0.0.40
codegen_flags: <defaults>
</compile_context>

<pallas_src>
import jax
import jax.numpy as jnp
from jax.experimental import pallas as pl
from jax.experimental.pallas import tpu as pltpu


def _deform_kernel(f2_ref, vt_ref, w2_ref, b2_ref, w3_ref, b3_ref,
                   w4_ref, b4_ref, out_ref):
    # One chunk of T meshes per grid step; all activations are (T*V, 256).
    T = f2_ref.shape[1]
    V = vt_ref.shape[0]

    f2 = f2_ref[0]            # (T, 256)  feat @ Wd1[:256]   (per-mesh rows)
    vt = vt_ref[...]          # (V, 256)  verts @ Wd1[256:] + bd1   (constant)

    # First deform layer: relu(feat-part + vert-part), expanded once per step.
    h1 = jnp.maximum(f2[:, None, :] + vt[None, :, :], 0.0).reshape(T * V, 256)

    h2 = jnp.maximum(
        jnp.dot(h1, w2_ref[...], preferred_element_type=jnp.float32) + b2_ref[...],
        0.0)
    h3 = jnp.maximum(
        jnp.dot(h2, w3_ref[...], preferred_element_type=jnp.float32) + b3_ref[...],
        0.0)
    off = jnp.dot(h3, w4_ref[...], preferred_element_type=jnp.float32) + b4_ref[...]

    out_ref[0] = off          # (T*V, 128) lane-dense store (cols 3..127 are zero)


def shape_decoder_forward(shape_feat, template_verts, params, meshes_per_step=None):
    """shape_feat: (B, O, L) f32; template_verts: (V, 3) f32.
    Returns new padded vertices (B*O, V, 3) = verts + mlp_deform(cat(mlp_feat, verts))."""
    B, O, L = shape_feat.shape
    M = B * O
    V = template_verts.shape[0]
    (wf1, bf1, wf2, bf2, wd1f, wd1v, bd1, wd2, bd2, wd3, bd3, wd4, bd4) = params

    # --- hoisted out of the kernel (tiny, M-row matmuls; one XLA pass) ---
    x = shape_feat.reshape(M, L)
    feat = jnp.maximum(x @ wf1 + bf1, 0.0) @ wf2 + bf2       # (M, 256)  mlp_feat
    feat2 = feat @ wd1f                                      # (M, 256)  feat-part of deform[0]

    # --- per-mesh constant term of deform[0] ---
    vterm = template_verts @ wd1v + bd1                      # (V, 256)

    # --- lane-dense final layer: pad Linear(256,3) to 128 output columns ---
    OUTP = 128
    wd4p = jnp.zeros((256, OUTP), jnp.float32).at[:, :3].set(wd4)
    bd4p = jnp.zeros((1, OUTP), jnp.float32).at[:, :3].set(bd4)

    # --- batch T meshes per grid step so activation rows hit >= 256 ---
    if meshes_per_step is None:
        meshes_per_step = max(1, 256 // V)                   # V=64 -> T=4 -> 256 rows
    T = meshes_per_step
    n_chunks = pl.cdiv(M, T)
    M_pad = n_chunks * T
    if M_pad != M:
        feat2 = jnp.pad(feat2, ((0, M_pad - M), (0, 0)))
    feat2_chunks = feat2.reshape(n_chunks, T, 256)

    def const_spec(arr):
        nd = arr.ndim
        return pl.BlockSpec(arr.shape, lambda c, _nd=nd: (0,) * _nd)

    grid_spec = pltpu.PrefetchScalarGridSpec(
        num_scalar_prefetch=0,
        grid=(n_chunks,),
        in_specs=[
            pl.BlockSpec((1, T, 256), lambda c: (c, 0, 0)),  # this chunk's feat rows
            const_spec(vterm),                               # VMEM-resident constants
            const_spec(wd2), const_spec(bd2),
            const_spec(wd3), const_spec(bd3),
            const_spec(wd4p), const_spec(bd4p),
        ],
        out_specs=pl.BlockSpec((1, T * V, OUTP), lambda c: (c, 0, 0)),
    )

    out = pl.pallas_call(
        _deform_kernel,
        out_shape=jax.ShapeDtypeStruct((n_chunks, T * V, OUTP), jnp.float32),
        grid_spec=grid_spec,
        compiler_params=pltpu.CompilerParams(
            dimension_semantics=("parallel",)),
    )(feat2_chunks, vterm, wd2, bd2, wd3, bd3, wd4p, bd4p)

    # Slice away mesh padding and lane padding; add template verts (never
    # materialized as an (M,V,3) HBM array for the kernel).
    offsets = out.reshape(M_pad, V, OUTP)[:M, :, :3]
    return template_verts[None, :, :] + offsets


def init_params(key, L):
    """Deterministic synthetic init. Weights stored (in_dim, out_dim); biases (1, out_dim)."""
    ks = jax.random.split(key, 13)

    def lin(k, fan_in, fan_out):
        kw, kb = jax.random.split(k)
        bound = 1.0 / jnp.sqrt(fan_in)
        w = jax.random.uniform(kw, (fan_in, fan_out), jnp.float32, -bound, bound)
        b = jax.random.uniform(kb, (1, fan_out), jnp.float32, -bound, bound)
        return w, b

    wf1, bf1 = lin(ks[0], L, 512)        # mlp_feat[0]
    wf2, bf2 = lin(ks[1], 512, 256)      # mlp_feat[2]
    wd1, bd1 = lin(ks[2], 256 + 3, 256)  # mlp_deform[0]  (input = cat(feat, verts))
    wd1f, wd1v = wd1[:256], wd1[256:]    # exact split of the same weight
    wd2, bd2 = lin(ks[3], 256, 256)      # mlp_deform[2]
    wd3, bd3 = lin(ks[4], 256, 256)      # mlp_deform[4]
    wd4, bd4 = lin(ks[5], 256, 3)        # mlp_deform[6]
    return (wf1, bf1, wf2, bf2, wd1f, wd1v, bd1, wd2, bd2, wd3, bd3, wd4, bd4)


def reference_forward(shape_feat, template_verts, params):
    (wf1, bf1, wf2, bf2, wd1f, wd1v, bd1, wd2, bd2, wd3, bd3, wd4, bd4) = params
    B, O, L = shape_feat.shape
    M = B * O
    V = template_verts.shape[0]
    x = shape_feat.reshape(M, L)
    feat = jnp.maximum(x @ wf1 + bf1, 0.0) @ wf2 + bf2                    # (M, 256)
    verts = jnp.broadcast_to(template_verts[None], (M, V, 3))
    featv = jnp.broadcast_to(feat[:, None, :], (M, V, 256))
    cat = jnp.concatenate([featv, verts], axis=-1)                        # (M, V, 259)
    wd1 = jnp.concatenate([wd1f, wd1v], axis=0)
    h = jnp.maximum(cat @ wd1 + bd1, 0.0)
    h = jnp.maximum(h @ wd2 + bd2, 0.0)
    h = jnp.maximum(h @ wd3 + bd3, 0.0)
    off = h @ wd4 + bd4
    return verts + off


if __name__ == "__main__":
    key = jax.random.PRNGKey(0)
    k_feat, k_verts, k_params = jax.random.split(key, 3)

    # batch, objects per batch, backbone_latent_len, template vertices
    B, O, L, V = 2, 3, 32, 64   # V must be a multiple of 8 (pad host-side otherwise)

    shape_feat = jax.random.normal(k_feat, (B, O, L), jnp.float32)
    # deterministic template "sphere-ish" vertices (stand-in for self.src_mesh)
    raw = jax.random.normal(k_verts, (V, 3), jnp.float32)
    template_verts = raw / (jnp.linalg.norm(raw, axis=-1, keepdims=True) + 1e-6)

    params = init_params(k_params, L)

    out = shape_decoder_forward(shape_feat, template_verts, params)
    out = jax.block_until_ready(out)

    ref = reference_forward(shape_feat, template_verts, params)
    assert out.shape == (B * O, V, 3)
    assert jnp.allclose(out, ref, atol=2e-4, rtol=2e-4)
    print("KERNEL_OK")
</pallas_src>

<mosaic_0001>
module attributes {stable_mosaic.version = 11 : i64} {
  func.func @_deform_kernel(%arg0: i32, %arg1: memref<1x4x256xf32, #tpu.memory_space<vmem>>, %arg2: memref<64x256xf32, #tpu.memory_space<vmem>>, %arg3: memref<256x256xf32, #tpu.memory_space<vmem>>, %arg4: memref<1x256xf32, #tpu.memory_space<vmem>>, %arg5: memref<256x256xf32, #tpu.memory_space<vmem>>, %arg6: memref<1x256xf32, #tpu.memory_space<vmem>>, %arg7: memref<256x128xf32, #tpu.memory_space<vmem>>, %arg8: memref<1x128xf32, #tpu.memory_space<vmem>>, %arg9: memref<1x256x128xf32, #tpu.memory_space<vmem>>) attributes {dimension_semantics = [#tpu.dimension_semantics<parallel>], iteration_bounds = array<i64: 2>, scalar_prefetch = 0 : i64, scratch_operands = 0 : i64, tpu.core_type = #tpu.core_type<tc>, window_params = [{transform_indices = @transform_0, window_bounds = array<i64: 1, 4, 256>}, {pipeline_mode = #tpu.pipeline_mode<synchronous>, transform_indices = @transform_1, window_bounds = array<i64: 64, 256>}, {pipeline_mode = #tpu.pipeline_mode<synchronous>, transform_indices = @transform_2, window_bounds = array<i64: 256, 256>}, {pipeline_mode = #tpu.pipeline_mode<synchronous>, transform_indices = @transform_3, window_bounds = array<i64: 1, 256>}, {pipeline_mode = #tpu.pipeline_mode<synchronous>, transform_indices = @transform_4, window_bounds = array<i64: 256, 256>}, {pipeline_mode = #tpu.pipeline_mode<synchronous>, transform_indices = @transform_5, window_bounds = array<i64: 1, 256>}, {pipeline_mode = #tpu.pipeline_mode<synchronous>, transform_indices = @transform_6, window_bounds = array<i64: 256, 128>}, {pipeline_mode = #tpu.pipeline_mode<synchronous>, transform_indices = @transform_7, window_bounds = array<i64: 1, 128>}, {transform_indices = @transform_8, window_bounds = array<i64: 1, 256, 128>}]} {
    %c0 = arith.constant 0 : index
    %c0_0 = arith.constant 0 : index
    %c0_1 = arith.constant 0 : index
    %0 = vector.load %arg1[%c0, %c0_0, %c0_1] : memref<1x4x256xf32, #tpu.memory_space<vmem>>, vector<1x4x256xf32>
    %1 = vector.shape_cast %0 : vector<1x4x256xf32> to vector<4x256xf32>
    %c0_2 = arith.constant 0 : index
    %c0_3 = arith.constant 0 : index
    %2 = vector.load %arg2[%c0_2, %c0_3] : memref<64x256xf32, #tpu.memory_space<vmem>>, vector<64x256xf32>
    %3 = vector.shape_cast %1 : vector<4x256xf32> to vector<4x1x256xf32>
    %4 = vector.shape_cast %2 : vector<64x256xf32> to vector<1x64x256xf32>
    %5 = vector.broadcast %3 : vector<4x1x256xf32> to vector<4x64x256xf32>
    %6 = vector.broadcast %4 : vector<1x64x256xf32> to vector<4x64x256xf32>
    %7 = arith.addf %5, %6 : vector<4x64x256xf32>
    %cst = arith.constant 0.000000e+00 : f32
    %8 = vector.broadcast %cst : f32 to vector<4x64x256xf32>
    %9 = arith.maximumf %7, %8 : vector<4x64x256xf32>
    %10 = vector.shape_cast %9 : vector<4x64x256xf32> to vector<256x256xf32>
    %c0_4 = arith.constant 0 : index
    %c0_5 = arith.constant 0 : index
    %11 = vector.load %arg3[%c0_4, %c0_5] : memref<256x256xf32, #tpu.memory_space<vmem>>, vector<256x256xf32>
    %cst_6 = arith.constant dense<0.000000e+00> : vector<256x256xf32>
    %12 = tpu.matmul %10, %11, %cst_6 {dimension_numbers = #tpu.dot_dimension_numbers<[1], [0], [0], [1], [0, 0, 1, 1], [], []>} : vector<256x256xf32>, vector<256x256xf32>, vector<256x256xf32> -> vector<256x256xf32>
    %c0_7 = arith.constant 0 : index
    %c0_8 = arith.constant 0 : index
    %13 = vector.load %arg4[%c0_7, %c0_8] : memref<1x256xf32, #tpu.memory_space<vmem>>, vector<1x256xf32>
    %14 = vector.broadcast %13 : vector<1x256xf32> to vector<256x256xf32>
    %15 = arith.addf %12, %14 : vector<256x256xf32>
    %cst_9 = arith.constant 0.000000e+00 : f32
    %16 = vector.broadcast %cst_9 : f32 to vector<256x256xf32>
    %17 = arith.maximumf %15, %16 : vector<256x256xf32>
    %c0_10 = arith.constant 0 : index
    %c0_11 = arith.constant 0 : index
    %18 = vector.load %arg5[%c0_10, %c0_11] : memref<256x256xf32, #tpu.memory_space<vmem>>, vector<256x256xf32>
    %cst_12 = arith.constant dense<0.000000e+00> : vector<256x256xf32>
    %19 = tpu.matmul %17, %18, %cst_12 {dimension_numbers = #tpu.dot_dimension_numbers<[1], [0], [0], [1], [0, 0, 1, 1], [], []>} : vector<256x256xf32>, vector<256x256xf32>, vector<256x256xf32> -> vector<256x256xf32>
    %c0_13 = arith.constant 0 : index
    %c0_14 = arith.constant 0 : index
    %20 = vector.load %arg6[%c0_13, %c0_14] : memref<1x256xf32, #tpu.memory_space<vmem>>, vector<1x256xf32>
    %21 = vector.broadcast %20 : vector<1x256xf32> to vector<256x256xf32>
    %22 = arith.addf %19, %21 : vector<256x256xf32>
    %cst_15 = arith.constant 0.000000e+00 : f32
    %23 = vector.broadcast %cst_15 : f32 to vector<256x256xf32>
    %24 = arith.maximumf %22, %23 : vector<256x256xf32>
    %c0_16 = arith.constant 0 : index
    %c0_17 = arith.constant 0 : index
    %25 = vector.load %arg7[%c0_16, %c0_17] : memref<256x128xf32, #tpu.memory_space<vmem>>, vector<256x128xf32>
    %cst_18 = arith.constant dense<0.000000e+00> : vector<256x128xf32>
    %26 = tpu.matmul %24, %25, %cst_18 {dimension_numbers = #tpu.dot_dimension_numbers<[1], [0], [0], [1], [0, 0, 1, 1], [], []>} : vector<256x256xf32>, vector<256x128xf32>, vector<256x128xf32> -> vector<256x128xf32>
    %c0_19 = arith.constant 0 : index
    %c0_20 = arith.constant 0 : index
    %27 = vector.load %arg8[%c0_19, %c0_20] : memref<1x128xf32, #tpu.memory_space<vmem>>, vector<1x128xf32>
    %28 = vector.broadcast %27 : vector<1x128xf32> to vector<256x128xf32>
    %29 = arith.addf %26, %28 : vector<256x128xf32>
    %c0_21 = arith.constant 0 : index
    %c0_22 = arith.constant 0 : index
    %c0_23 = arith.constant 0 : index
    %30 = vector.load %arg9[%c0_21, %c0_22, %c0_23] : memref<1x256x128xf32, #tpu.memory_space<vmem>>, vector<1x256x128xf32>
    %31 = vector.shape_cast %30 : vector<1x256x128xf32> to vector<256x128xf32>
    %32 = vector.shape_cast %29 : vector<256x128xf32> to vector<1x256x128xf32>
    tpu.vector_store %arg9[%c0_21, %c0_22, %c0_23], %32 {strides = array<i32>} : memref<1x256x128xf32, #tpu.memory_space<vmem>>, vector<1x256x128xf32>,
    return
  }
  func.func @transform_0(%arg0: i32) -> (i32, i32, i32) {
    %c0_i32 = arith.constant 0 : i32
    %c0_i32_0 = arith.constant 0 : i32
    %c0_i32_1 = arith.constant 0 : i32
    return %arg0, %c0_i32, %c0_i32_0 : i32, i32, i32
  }
  func.func @transform_1(%arg0: i32) -> (i32, i32) {
    %c0_i32 = arith.constant 0 : i32
    %c0_i32_0 = arith.constant 0 : i32
    %c0_i32_1 = arith.constant 0 : i32
    return %c0_i32, %c0_i32_0 : i32, i32
  }
  func.func @transform_2(%arg0: i32) -> (i32, i32) {
    %c0_i32 = arith.constant 0 : i32
    %c0_i32_0 = arith.constant 0 : i32
    %c0_i32_1 = arith.constant 0 : i32
    return %c0_i32, %c0_i32_0 : i32, i32
  }
  func.func @transform_3(%arg0: i32) -> (i32, i32) {
    %c0_i32 = arith.constant 0 : i32
    %c0_i32_0 = arith.constant 0 : i32
    %c0_i32_1 = arith.constant 0 : i32
    return %c0_i32, %c0_i32_0 : i32, i32
  }
  func.func @transform_4(%arg0: i32) -> (i32, i32) {
    %c0_i32 = arith.constant 0 : i32
    %c0_i32_0 = arith.constant 0 : i32
    %c0_i32_1 = arith.constant 0 : i32
    return %c0_i32, %c0_i32_0 : i32, i32
  }
  func.func @transform_5(%arg0: i32) -> (i32, i32) {
    %c0_i32 = arith.constant 0 : i32
    %c0_i32_0 = arith.constant 0 : i32
    %c0_i32_1 = arith.constant 0 : i32
    return %c0_i32, %c0_i32_0 : i32, i32
  }
  func.func @transform_6(%arg0: i32) -> (i32, i32) {
    %c0_i32 = arith.constant 0 : i32
    %c0_i32_0 = arith.constant 0 : i32
    %c0_i32_1 = arith.constant 0 : i32
    return %c0_i32, %c0_i32_0 : i32, i32
  }
  func.func @transform_7(%arg0: i32) -> (i32, i32) {
    %c0_i32 = arith.constant 0 : i32
    %c0_i32_0 = arith.constant 0 : i32
    %c0_i32_1 = arith.constant 0 : i32
    return %c0_i32, %c0_i32_0 : i32, i32
  }
  func.func @transform_8(%arg0: i32) -> (i32, i32, i32) {
    %c0_i32 = arith.constant 0 : i32
    %c0_i32_0 = arith.constant 0 : i32
    %c0_i32_1 = arith.constant 0 : i32
    return %arg0, %c0_i32, %c0_i32_0 : i32, i32, i32
  }
}

</mosaic_0001>

<llo_original>
// kernel: tpu_custom_call.1
$region0: #{tpu_custom_call.1}
  #allocation0 [shape = 'u32[]', space=smem, size = 0x4, offset = 0x4, fixed_abs, tag = 'smem constant byte address 0x4 - core index']
  #allocation1 [shape = 'u32[144,128]{1,0:T(1,128)}', space=vmem, size = 0x12000, scoped, tag = 'internal scratch']
  %s0 = inlined_call_operand.hbm [shape: f32[2,4,256], index: 0, kind: input, shape index: {}]
  %s1 = inlined_call_operand.hbm [shape: f32[64,256], index: 1, kind: input, shape index: {}]
  %s2 = inlined_call_operand.hbm [shape: f32[256,256], index: 2, kind: input, shape index: {}]
  %s3 = inlined_call_operand.vmem [shape: f32[1,256], index: 3, kind: input, shape index: {}]
  %s4 = inlined_call_operand.hbm [shape: f32[256,256], index: 4, kind: input, shape index: {}]
  %s5 = inlined_call_operand.vmem [shape: f32[1,256], index: 5, kind: input, shape index: {}]
  %s6 = inlined_call_operand.hbm [shape: f32[256,128], index: 6, kind: input, shape index: {}]
  %s7 = inlined_call_operand.vmem [shape: f32[1,128], index: 7, kind: input, shape index: {}]
  %s8 = inlined_call_operand.hbm [shape: f32[2,256,128], index: 8, kind: output, shape index: {}]
  %s9 = sld [smem:[#allocation0]]
  $region85: #{tpu_custom_call.1} parent=0
    _
  %s11 = ssub.s32 1, %s9
  %s12 = scalar_select 0, %s11, %s9
  $region1: #{tpu_custom_call.1} parent=0
    #allocation2 [shape = 'u8[8192]{0}', space=vmem, size = 0x2000, scoped, tag = 'input window, operand 0']
    #allocation3 [shape = 's32[2]{0}', space=sflag, size = 0x8, scoped, tag = 'scoped memory for tpu_custom_call.1']
    #allocation4 [shape = 's32[2]{0}', space=sflag, size = 0x8, scoped, tag = 'scoped memory for tpu_custom_call.1']
    #allocation5 [shape = 'u8[65536]{0}', space=vmem, size = 0x10000, scoped, tag = 'input window, operand 1, single buffered']
    #allocation6 [shape = 's32[1]{0}', space=sflag, size = 0x4, scoped, tag = 'scoped memory for tpu_custom_call.1']
    #allocation7 [shape = 'u8[262144]{0}', space=vmem, size = 0x40000, scoped, tag = 'input window, operand 2, single buffered']
    #allocation8 [shape = 'u8[262144]{0}', space=vmem, size = 0x40000, scoped, tag = 'input window, operand 4, single buffered']
    #allocation9 [shape = 's32[1]{0}', space=sflag, size = 0x4, scoped, tag = 'scoped memory for tpu_custom_call.1']
    #allocation10 [shape = 'u8[131072]{0}', space=vmem, size = 0x20000, scoped, tag = 'input window, operand 6, single buffered']
    #allocation11 [shape = 'u8[262144]{0}', space=vmem, size = 0x40000, scoped, tag = 'output window, operand 0']
    %13 = vsyncpa [#allocation3], 0
    %s14 = scalar_lea.sflag [#allocation3], 1
    %15 = vsyncpa %s14, 0
    %16 = vsyncpa [#allocation6], 0
    %17 = vsyncpa [#allocation9], 0
    %18 = vsyncpa [#allocation4], 0
    %s19 = scalar_lea.sflag [#allocation4], 1
    %20 = vsyncpa %s19, 0
    loop: start=0, step=1, limit=4
    $region2: #{tpu_custom_call.1} parent=1 // loop_pre_header
      _
    $region3: #{tpu_custom_call.1} parent=1 // loop_header
      %s22 = sphi 0, %s26
      %p23 = scmp.ge.s32.totalorder %s22, 4
      %s32 = sphi 0, %s34
      %s35 = sphi 0, %s32
      %s36 = sphi 0, %s35
      %s52 = sphi 0, %s36
      %s56 = sphi 0, %s56
      %s58 = sphi 0, %s56
      %s59 = sphi 0, %s58
      %s73 = sphi 0, %s59
      %s77 = sphi 0, %s77
      %s79 = sphi 0, %s77
      %s80 = sphi 0, %s79
      %s94 = sphi 0, %s80
      %s98 = sphi 0, %s98
      %s100 = sphi 0, %s98
      %s101 = sphi 0, %s100
      %s115 = sphi 0, %s101
      %s119 = sphi 0, %s119
      %s121 = sphi 0, %s119
      %s122 = sphi 0, %s121
      %s136 = sphi 0, %s122
      %s140 = sphi 0, %s140
      %s142 = sphi 0, %s140
      %s143 = sphi 0, %s142
      %s157 = sphi 0, %s143
      %s161 = sphi 0, %s161
      %s163 = sphi 0, %s161
      %s164 = sphi 0, %s163
      %s178 = sphi 0, %s164
      %s182 = sphi 0, %s182
      %s184 = sphi 0, %s182
      %s185 = sphi 0, %s184
      %s199 = sphi 0, %s185
      %s205 = sphi 0, %s207
      %s208 = sphi 0, %s205
      %s209 = sphi 0, %s208
      %s225 = sphi 0, %s209
    $region4: #{tpu_custom_call.1} parent=1 // loop_header_branch
      %25 = sbr.rel (%p23) target = $region8
    $region5: #{tpu_custom_call.1} parent=1 // loop_body
      %s27 = ssub.s32 %s22, 1
      %s28 = ssub.s32 %s22, 2
      %s29 = sadd.s32 %s22, 1
      %s30 = ssub.s32 %s22, %s29
      %p31 = scmp.eq.s32.totalorder %s30, 0
      %s33 = sadd.s32 %s32, 1
      %s34 = scalar_select %p31, %s32, %s33
      %p37 = pneg %p31
      %p38 = scmp.eq.s32.totalorder %s22, 1
      %p39 = por %p37, %p38
      %p40 = scmp.ne.s32.totalorder %s32, %s35
      %p41 = scmp.eq.s32.totalorder %s22, 0
      %p42 = por %p40, %p41
      %p43 = scmp.ne.s32.totalorder %s32, %s35
      %p44 = scmp.eq.s32.totalorder %s27, 1
      %p45 = por %p43, %p44
      %p46 = scmp.ne.s32.totalorder %s35, %s36
      %p47 = scmp.eq.s32.totalorder %s27, 0
      %p48 = por %p46, %p47
      %p49 = scmp.ne.s32.totalorder %s35, %s36
      %p50 = scmp.eq.s32.totalorder %s28, 1
      %p51 = por %p49, %p50
      %p53 = scmp.ne.s32.totalorder %s36, %s52
      %p54 = scmp.eq.s32.totalorder %s28, 0
      %p55 = por %p53, %p54
      %s57 = sadd.s32 %s56, 1
      %p60 = scmp.eq.s32.totalorder %s22, 1
      %p61 = scmp.ne.s32.totalorder %s56, %s58
      %p62 = scmp.eq.s32.totalorder %s22, 0
      %p63 = por %p61, %p62
      %p64 = scmp.ne.s32.totalorder %s56, %s58
      %p65 = scmp.eq.s32.totalorder %s27, 1
      %p66 = por %p64, %p65
      %p67 = scmp.ne.s32.totalorder %s58, %s59
      %p68 = scmp.eq.s32.totalorder %s27, 0
      %p69 = por %p67, %p68
      %p70 = scmp.ne.s32.totalorder %s58, %s59
      %p71 = scmp.eq.s32.totalorder %s28, 1
      %p72 = por %p70, %p71
      %p74 = scmp.ne.s32.totalorder %s59, %s73
      %p75 = scmp.eq.s32.totalorder %s28, 0
      %p76 = por %p74, %p75
      %s78 = sadd.s32 %s77, 1
      %p81 = scmp.eq.s32.totalorder %s22, 1
      %p82 = scmp.ne.s32.totalorder %s77, %s79
      %p83 = scmp.eq.s32.totalorder %s22, 0
      %p84 = por %p82, %p83
      %p85 = scmp.ne.s32.totalorder %s77, %s79
      %p86 = scmp.eq.s32.totalorder %s27, 1
      %p87 = por %p85, %p86
      %p88 = scmp.ne.s32.totalorder %s79, %s80
      %p89 = scmp.eq.s32.totalorder %s27, 0
      %p90 = por %p88, %p89
      %p91 = scmp.ne.s32.totalorder %s79, %s80
      %p92 = scmp.eq.s32.totalorder %s28, 1
      %p93 = por %p91, %p92
      %p95 = scmp.ne.s32.totalorder %s80, %s94
      %p96 = scmp.eq.s32.totalorder %s28, 0
      %p97 = por %p95, %p96
      %s99 = sadd.s32 %s98, 1
      %p102 = scmp.eq.s32.totalorder %s22, 1
      %p103 = scmp.ne.s32.totalorder %s98, %s100
      %p104 = scmp.eq.s32.totalorder %s22, 0
      %p105 = por %p103, %p104
      %p106 = scmp.ne.s32.totalorder %s98, %s100
      %p107 = scmp.eq.s32.totalorder %s27, 1
      %p108 = por %p106, %p107
      %p109 = scmp.ne.s32.totalorder %s100, %s101
      %p110 = scmp.eq.s32.totalorder %s27, 0
      %p111 = por %p109, %p110
      %p112 = scmp.ne.s32.totalorder %s100, %s101
      %p113 = scmp.eq.s32.totalorder %s28, 1
      %p114 = por %p112, %p113
      %p116 = scmp.ne.s32.totalorder %s101, %s115
      %p117 = scmp.eq.s32.totalorder %s28, 0
      %p118 = por %p116, %p117
      %s120 = sadd.s32 %s119, 1
      %p123 = scmp.eq.s32.totalorder %s22, 1
      %p124 = scmp.ne.s32.totalorder %s119, %s121
      %p125 = scmp.eq.s32.totalorder %s22, 0
      %p126 = por %p124, %p125
      %p127 = scmp.ne.s32.totalorder %s119, %s121
      %p128 = scmp.eq.s32.totalorder %s27, 1
      %p129 = por %p127, %p128
      %p130 = scmp.ne.s32.totalorder %s121, %s122
      %p131 = scmp.eq.s32.totalorder %s27, 0
      %p132 = por %p130, %p131
      %p133 = scmp.ne.s32.totalorder %s121, %s122
      %p134 = scmp.eq.s32.totalorder %s28, 1
      %p135 = por %p133, %p134
      %p137 = scmp.ne.s32.totalorder %s122, %s136
      %p138 = scmp.eq.s32.totalorder %s28, 0
      %p139 = por %p137, %p138
      %s141 = sadd.s32 %s140, 1
      %p144 = scmp.eq.s32.totalorder %s22, 1
      %p145 = scmp.ne.s32.totalorder %s140, %s142
      %p146 = scmp.eq.s32.totalorder %s22, 0
      %p147 = por %p145, %p146
      %p148 = scmp.ne.s32.totalorder %s140, %s142
      %p149 = scmp.eq.s32.totalorder %s27, 1
      %p150 = por %p148, %p149
      %p151 = scmp.ne.s32.totalorder %s142, %s143
      %p152 = scmp.eq.s32.totalorder %s27, 0
      %p153 = por %p151, %p152
      %p154 = scmp.ne.s32.totalorder %s142, %s143
      %p155 = scmp.eq.s32.totalorder %s28, 1
      %p156 = por %p154, %p155
      %p158 = scmp.ne.s32.totalorder %s143, %s157
      %p159 = scmp.eq.s32.totalorder %s28, 0
      %p160 = por %p158, %p159
      %s162 = sadd.s32 %s161, 1
      %p165 = scmp.eq.s32.totalorder %s22, 1
      %p166 = scmp.ne.s32.totalorder %s161, %s163
      %p167 = scmp.eq.s32.totalorder %s22, 0
      %p168 = por %p166, %p167
      %p169 = scmp.ne.s32.totalorder %s161, %s163
      %p170 = scmp.eq.s32.totalorder %s27, 1
      %p171 = por %p169, %p170
      %p172 = scmp.ne.s32.totalorder %s163, %s164
      %p173 = scmp.eq.s32.totalorder %s27, 0
      %p174 = por %p172, %p173
      %p175 = scmp.ne.s32.totalorder %s163, %s164
      %p176 = scmp.eq.s32.totalorder %s28, 1
      %p177 = por %p175, %p176
      %p179 = scmp.ne.s32.totalorder %s164, %s178
      %p180 = scmp.eq.s32.totalorder %s28, 0
      %p181 = por %p179, %p180
      %s183 = sadd.s32 %s182, 1
      %p186 = scmp.eq.s32.totalorder %s22, 1
      %p187 = scmp.ne.s32.totalorder %s182, %s184
      %p188 = scmp.eq.s32.totalorder %s22, 0
      %p189 = por %p187, %p188
      %p190 = scmp.ne.s32.totalorder %s182, %s184
      %p191 = scmp.eq.s32.totalorder %s27, 1
      %p192 = por %p190, %p191
      %p193 = scmp.ne.s32.totalorder %s184, %s185
      %p194 = scmp.eq.s32.totalorder %s27, 0
      %p195 = por %p193, %p194
      %p196 = scmp.ne.s32.totalorder %s184, %s185
      %p197 = scmp.eq.s32.totalorder %s28, 1
      %p198 = por %p196, %p197
      %p200 = scmp.ne.s32.totalorder %s185, %s199
      %p201 = scmp.eq.s32.totalorder %s28, 0
      %p202 = por %p200, %p201
      %s203 = ssub.s32 %s22, %s29
      %p204 = scmp.eq.s32.totalorder %s203, 0
      %s206 = sadd.s32 %s205, 1
      %s207 = scalar_select %p204, %s205, %s206
      %p210 = pneg %p204
      %p211 = scmp.eq.s32.totalorder %s22, 1
      %p212 = por %p210, %p211
      %p213 = scmp.ne.s32.totalorder %s205, %s208
      %p214 = scmp.eq.s32.totalorder %s22, 0
      %p215 = por %p213, %p214
      %p216 = scmp.ne.s32.totalorder %s205, %s208
      %p217 = scmp.eq.s32.totalorder %s27, 1
      %p218 = por %p216, %p217
      %p219 = scmp.ne.s32.totalorder %s208, %s209
      %p220 = scmp.eq.s32.totalorder %s27, 0
      %p221 = por %p219, %p220
      %p222 = scmp.ne.s32.totalorder %s208, %s209
      %p223 = scmp.eq.s32.totalorder %s28, 1
      %p224 = por %p222, %p223
      %p226 = scmp.ne.s32.totalorder %s209, %s225
      %p227 = scmp.eq.s32.totalorder %s28, 0
      %p228 = por %p226, %p227
      %p229 = scmp.le.s32.totalorder 1, %s22
      %p230 = scmp.lt.s32.totalorder %s22, 3
      %p231 = pnand %p229, %p230
      %p232 = pneg %p231
      // Predicated region
      $region9: #{tpu_custom_call.1} parent=5 // pred_check
        _
      $region10: #{tpu_custom_call.1} parent=5 // pred_check_branch
        %234 = sbr.rel (%p231) target = $region12
      $region11: #{tpu_custom_call.1} parent=5 // pred_region
        %s235 = ssub.s32 %s22, 1
        // Predicated region
        $region13: #{tpu_custom_call.1} parent=11 // pred_check
          %p236 = pneg %p69
        $region14: #{tpu_custom_call.1} parent=11 // pred_check_branch
          %238 = sbr.rel (%p236) target = $region16
        $region15: #{tpu_custom_call.1} parent=11 // pred_region
          %s240 = ssub.s32 2048, 2048
          %241 = vsyncadd [#allocation6], %s240
          %s242 = sshll.u32 [#allocation5], 4
          %s243 = int_to_ptr.vmem [resolvable:$true] %s242
          %248 = dma.hbm_to_vmem [thread:$0]  %s1, 2048, %s243, [#allocation6], 256, 256, 16
        $region16: #{tpu_custom_call.1} parent=11 // pred_fallthru
          _
        // Predicated region
        $region17: #{tpu_custom_call.1} parent=11 // pred_check
          %p249 = pneg %p90
        $region18: #{tpu_custom_call.1} parent=11 // pred_check_branch
          %251 = sbr.rel (%p249) target = $region20
        $region19: #{tpu_custom_call.1} parent=11 // pred_region
          %s253 = ssub.s32 8192, 8192
          %254 = vsyncadd [#allocation6], %s253
          %s255 = sshll.u32 [#allocation7], 4
          %s256 = int_to_ptr.vmem [resolvable:$true] %s255
          %261 = dma.hbm_to_vmem [thread:$0]  %s2, 8192, %s256, [#allocation6], 256, 256, 16
        $region20: #{tpu_custom_call.1} parent=11 // pred_fallthru
          _
        // Predicated region
        $region21: #{tpu_custom_call.1} parent=11 // pred_check
          %p262 = pneg %p111
        $region22: #{tpu_custom_call.1} parent=11 // pred_check_branch
          %264 = sbr.rel (%p262) target = $region24
        $region23: #{tpu_custom_call.1} parent=11 // pred_region
          _
        $region24: #{tpu_custom_call.1} parent=11 // pred_fallthru
          _
        // Predicated region
        $region25: #{tpu_custom_call.1} parent=11 // pred_check
          %p265 = pneg %p132
        $region26: #{tpu_custom_call.1} parent=11 // pred_check_branch
          %267 = sbr.rel (%p265) target = $region28
        $region27: #{tpu_custom_call.1} parent=11 // pred_region
          %s269 = ssub.s32 8192, 8192
          %270 = vsyncadd [#allocation9], %s269
          %s271 = sshll.u32 [#allocation8], 4
          %s272 = int_to_ptr.vmem [resolvable:$true] %s271
          %277 = dma.hbm_to_vmem [thread:$0]  %s4, 8192, %s272, [#allocation9], 256, 256, 16
        $region28: #{tpu_custom_call.1} parent=11 // pred_fallthru
          _
        // Predicated region
        $region29: #{tpu_custom_call.1} parent=11 // pred_check
          %p278 = pneg %p153
        $region30: #{tpu_custom_call.1} parent=11 // pred_check_branch
          %280 = sbr.rel (%p278) target = $region32
        $region31: #{tpu_custom_call.1} parent=11 // pred_region
          _
        $region32: #{tpu_custom_call.1} parent=11 // pred_fallthru
          _
        // Predicated region
        $region33: #{tpu_custom_call.1} parent=11 // pred_check
          %p281 = pneg %p174
        $region34: #{tpu_custom_call.1} parent=11 // pred_check_branch
          %283 = sbr.rel (%p281) target = $region36
        $region35: #{tpu_custom_call.1} parent=11 // pred_region
          %s285 = ssub.s32 4096, 4096
          %286 = vsyncadd [#allocation9], %s285
          %s287 = sshll.u32 [#allocation10], 4
          %s288 = int_to_ptr.vmem [resolvable:$true] %s287
          %293 = dma.hbm_to_vmem [thread:$0]  %s6, 4096, %s288, [#allocation9], 128, 128, 8
        $region36: #{tpu_custom_call.1} parent=11 // pred_fallthru
          _
        // Predicated region
        $region37: #{tpu_custom_call.1} parent=11 // pred_check
          %p294 = pneg %p195
        $region38: #{tpu_custom_call.1} parent=11 // pred_check_branch
          %296 = sbr.rel (%p294) target = $region40
        $region39: #{tpu_custom_call.1} parent=11 // pred_region
          _
        $region40: #{tpu_custom_call.1} parent=11 // pred_fallthru
          _
      $region12: #{tpu_custom_call.1} parent=5 // pred_fallthru
        _
      %p297 = scmp.lt.s32.totalorder %s22, 2
      // Predicated region
      $region41: #{tpu_custom_call.1} parent=5 // pred_check
        %p298 = pneg %p297
      $region42: #{tpu_custom_call.1} parent=5 // pred_check_branch
        %300 = sbr.rel (%p298) target = $region44
      $region43: #{tpu_custom_call.1} parent=5 // pred_region
        // Predicated region
        $region45: #{tpu_custom_call.1} parent=43 // pred_check
          %p301 = pneg %p42
        $region46: #{tpu_custom_call.1} parent=43 // pred_check_branch
          %303 = sbr.rel (%p301) target = $region48
        $region47: #{tpu_custom_call.1} parent=43 // pred_region
          %s304 = sand.u32 %s32, 1
          %s305 = scalar_lea.sflag [#allocation3], %s304
          %s306 = sand.u32 %s32, 1
          %s307 = smul.addr %s306, 8
          %s308 = scalar_lea.vmem [#allocation2], %s307
          %s310 = ssub.s32 128, 128
          %311 = vsyncadd %s305, %s310
          %s312 = smul.addr %s22, 2
          %s313 = smul.addr %s312, 64
          %s314 = scalar_lea.hbm %s0, %s313
          %s316 = sshll.u32 %s308, 4
          %s317 = int_to_ptr.vmem [resolvable:$true] %s316
          %319 = dma.hbm_to_vmem [thread:$0]  %s314, 128, %s317, %s305
        $region48: #{tpu_custom_call.1} parent=43 // pred_fallthru
          _
      $region44: #{tpu_custom_call.1} parent=5 // pred_fallthru
        _
      %p320 = scmp.le.s32.totalorder 1, %s22
      %p321 = scmp.lt.s32.totalorder %s22, 3
      %p322 = pnand %p320, %p321
      %p323 = pneg %p322
      // Predicated region
      $region49: #{tpu_custom_call.1} parent=5 // pred_check
        _
      $region50: #{tpu_custom_call.1} parent=5 // pred_check_branch
        %325 = sbr.rel (%p322) target = $region52
      $region51: #{tpu_custom_call.1} parent=5 // pred_region
        %s326 = ssub.s32 %s22, 1
        %s327 = sand.u32 %s35, 1
        %s328 = scalar_lea.sflag [#allocation3], %s327
        %s329 = sand.u32 %s35, 1
        %s330 = smul.addr %s329, 8
        %s331 = scalar_lea.vmem [#allocation2], %s330
        // Predicated region
        $region53: #{tpu_custom_call.1} parent=51 // pred_check
          %p332 = pneg %p48
        $region54: #{tpu_custom_call.1} parent=51 // pred_check_branch
          %334 = sbr.rel (%p332) target = $region56
        $region55: #{tpu_custom_call.1} parent=51 // pred_region
          %335 = dma.done %s328, 128
        $region56: #{tpu_custom_call.1} parent=51 // pred_fallthru
          _
        // Predicated region
        $region57: #{tpu_custom_call.1} parent=51 // pred_check
          %p336 = pneg %p69
        $region58: #{tpu_custom_call.1} parent=51 // pred_check_branch
          %338 = sbr.rel (%p336) target = $region60
        $region59: #{tpu_custom_call.1} parent=51 // pred_region
          %339 = dma.done [#allocation6], 2048
        $region60: #{tpu_custom_call.1} parent=51 // pred_fallthru
          _
        // Predicated region
        $region61: #{tpu_custom_call.1} parent=51 // pred_check
          %p340 = pneg %p90
        $region62: #{tpu_custom_call.1} parent=51 // pred_check_branch
          %342 = sbr.rel (%p340) target = $region64
        $region63: #{tpu_custom_call.1} parent=51 // pred_region
          %343 = dma.done [#allocation6], 8192
        $region64: #{tpu_custom_call.1} parent=51 // pred_fallthru
          _
        // Predicated region
        $region65: #{tpu_custom_call.1} parent=51 // pred_check
          %p344 = pneg %p132
        $region66: #{tpu_custom_call.1} parent=51 // pred_check_branch
          %346 = sbr.rel (%p344) target = $region68
        $region67: #{tpu_custom_call.1} parent=51 // pred_region
          %347 = dma.done [#allocation9], 8192
        $region68: #{tpu_custom_call.1} parent=51 // pred_fallthru
          _
        // Predicated region
        $region69: #{tpu_custom_call.1} parent=51 // pred_check
          %p348 = pneg %p174
        $region70: #{tpu_custom_call.1} parent=51 // pred_check_branch
          %350 = sbr.rel (%p348) target = $region72
        $region71: #{tpu_custom_call.1} parent=51 // pred_region
          %351 = dma.done [#allocation9], 4096
        $region72: #{tpu_custom_call.1} parent=51 // pred_fallthru
          _
        %s352 = sand.u32 %s35, 1
        %s353 = scalar_lea.sflag [#allocation3], %s352
        %s354 = sand.u32 %s35, 1
        %s355 = smul.addr %s354, 8
        %s356 = scalar_lea.vmem [#allocation2], %s355
        %p357 = pneg %p48
        %p358 = pneg %p45
        %p359 = pneg %p69
        %p360 = pneg %p66
        %p361 = pneg %p90
        %p362 = pneg %p87
        %p363 = pneg %p111
        %p364 = pneg %p108
        %p365 = pneg %p132
        %p366 = pneg %p129
        %p367 = pneg %p153
        %p368 = pneg %p150
        %p369 = pneg %p174
        %p370 = pneg %p171
        %p371 = pneg %p195
        %p372 = pneg %p192
        %p373 = pneg %p221
        %p374 = pneg %p218
        %s375 = sand.u32 %s208, 1
        %s376 = scalar_lea.sflag [#allocation4], %s375
        %s377 = sand.u32 %s208, 1
        %s378 = smul.addr %s377, 256
        %s379 = scalar_lea.vmem [#allocation11], %s378
        %v380 = vld [vmem:[%s331] sm:$0xff]
        %v381 = vld [vmem:[#allocation5] sm:$0xff]
        %v382 = vld [vmem:[#allocation5 + $0x8] sm:$0xff]
        %v383 = vld [vmem:[#allocation5 + $0x10] sm:$0xff]
        %v384 = vld [vmem:[#allocation5 + $0x18] sm:$0xff]
        %v385 = vld [vmem:[#allocation5 + $0x20] sm:$0xff]
        %v386 = vld [vmem:[#allocation5 + $0x28] sm:$0xff]
        %v387 = vld [vmem:[#allocation5 + $0x30] sm:$0xff]
        %v388 = vld [vmem:[#allocation5 + $0x38] sm:$0xff]
        %v389 = vld [vmem:[#allocation5 + $0x40] sm:$0xff]
        %v390 = vld [vmem:[#allocation5 + $0x48] sm:$0xff]
        %v391 = vld [vmem:[#allocation5 + $0x50] sm:$0xff]
        %v392 = vld [vmem:[#allocation5 + $0x58] sm:$0xff]
        %v393 = vld [vmem:[#allocation5 + $0x60] sm:$0xff]
        %v394 = vld [vmem:[#allocation5 + $0x68] sm:$0xff]
        %v395 = vld [vmem:[#allocation5 + $0x70] sm:$0xff]
        %v396 = vld [vmem:[#allocation5 + $0x78] sm:$0xff]
        %v399 = vunpack.c.l.s4 1966171168
        %v400 = vunpack.c.0.s8 %v399
        %v401 = vlaneseq
        %v402 = vshrl.u32 %v401, 7
        %v403 = vsub.s32 %v400, %v402
        %v404 = vrot.slane %v380, %v403
        %v405 = vcombine.high %v404, %v404
        %v407 = vunpack.c.l.s4 1966171168
        %v408 = vunpack.c.0.s8 %v407
        %v409 = vlaneseq
        %v410 = vshrl.u32 %v409, 7
        %v411 = vsub.s32 %v408, %v410
        %v412 = vrot.slane %v404, %v411
        %v414 = vunpack.c.l.s4 1966171168
        %v415 = vunpack.c.0.s8 %v414
        %v416 = vlaneseq
        %v417 = vshrl.u32 %v416, 7
        %v418 = vsub.s32 %v415, %v417
        %v419 = vrot.slane %v405, %v418
        %v420 = vcombine.high %v412, %v412
        %v421 = vcombine.high %v419, %v419
        %v422 = vlaneseq
        %v423 = vshrl.u32 %v422, 7
        %v424 = vsub.s32 0, %v423
        %v425 = vrot.slane %v412, %v424
        %v426 = vlaneseq
        %v427 = vshrl.u32 %v426, 7
        %v428 = vsub.s32 1, %v427
        %v429 = vrot.slane %v412, %v428
        %v430 = vlaneseq
        %v431 = vshrl.u32 %v430, 7
        %v432 = vsub.s32 0, %v431
        %v433 = vrot.slane %v419, %v432
        %v434 = vlaneseq
        %v435 = vshrl.u32 %v434, 7
        %v436 = vsub.s32 1, %v435
        %v437 = vrot.slane %v419, %v436
        %v438 = vlaneseq
        %v439 = vshrl.u32 %v438, 7
        %v440 = vsub.s32 0, %v439
        %v441 = vrot.slane %v420, %v440
        %v442 = vlaneseq
        %v443 = vshrl.u32 %v442, 7
        %v444 = vsub.s32 1, %v443
        %v445 = vrot.slane %v420, %v444
        %v446 = vlaneseq
        %v447 = vshrl.u32 %v446, 7
        %v448 = vsub.s32 0, %v447
        %v449 = vrot.slane %v421, %v448
        %v450 = vlaneseq
        %v451 = vshrl.u32 %v450, 7
        %v452 = vsub.s32 1, %v451
        %v453 = vrot.slane %v421, %v452
        %v462 = vadd.f32 %v425, %v381
        %v463 = vadd.f32 %v429, %v382
        %v464 = vadd.f32 %v425, %v383
        %v465 = vadd.f32 %v429, %v384
        %v466 = vadd.f32 %v425, %v385
        %v467 = vadd.f32 %v429, %v386
        %v468 = vadd.f32 %v425, %v387
        %v469 = vadd.f32 %v429, %v388
        %v470 = vadd.f32 %v425, %v389
        %v471 = vadd.f32 %v429, %v390
        %v472 = vadd.f32 %v425, %v391
        %v473 = vadd.f32 %v429, %v392
        %v474 = vadd.f32 %v425, %v393
        %v475 = vadd.f32 %v429, %v394
        %v476 = vadd.f32 %v425, %v395
        %v477 = vadd.f32 %v429, %v396
        %v478 = vadd.f32 %v433, %v381
        %v479 = vadd.f32 %v437, %v382
        %v480 = vadd.f32 %v433, %v383
        %v481 = vadd.f32 %v437, %v384
        %v482 = vadd.f32 %v433, %v385
        %v483 = vadd.f32 %v437, %v386
        %v484 = vadd.f32 %v433, %v387
        %v485 = vadd.f32 %v437, %v388
        %v486 = vadd.f32 %v433, %v389
        %v487 = vadd.f32 %v437, %v390
        %v488 = vadd.f32 %v433, %v391
        %v489 = vadd.f32 %v437, %v392
        %v490 = vadd.f32 %v433, %v393
        %v491 = vadd.f32 %v437, %v394
        %v492 = vadd.f32 %v433, %v395
        %v493 = vadd.f32 %v437, %v396
        %v494 = vadd.f32 %v441, %v381
        %v495 = vadd.f32 %v445, %v382
        %v496 = vadd.f32 %v441, %v383
        %v497 = vadd.f32 %v445, %v384
        %v498 = vadd.f32 %v441, %v385
        %v499 = vadd.f32 %v445, %v386
        %v500 = vadd.f32 %v441, %v387
        %v501 = vadd.f32 %v445, %v388
        %v502 = vadd.f32 %v441, %v389
        %v503 = vadd.f32 %v445, %v390
        %v504 = vadd.f32 %v441, %v391
        %v505 = vadd.f32 %v445, %v392
        %v506 = vadd.f32 %v441, %v393
        %v507 = vadd.f32 %v445, %v394
        %v508 = vadd.f32 %v441, %v395
        %v509 = vadd.f32 %v445, %v396
        %v510 = vadd.f32 %v449, %v381
        %v511 = vadd.f32 %v453, %v382
        %v512 = vadd.f32 %v449, %v383
        %v513 = vadd.f32 %v453, %v384
        %v514 = vadd.f32 %v449, %v385
        %v515 = vadd.f32 %v453, %v386
        %v516 = vadd.f32 %v449, %v387
        %v517 = vadd.f32 %v453, %v388
        %v518 = vadd.f32 %v449, %v389
        %v519 = vadd.f32 %v453, %v390
        %v520 = vadd.f32 %v449, %v391
        %v521 = vadd.f32 %v453, %v392
        %v522 = vadd.f32 %v449, %v393
        %v523 = vadd.f32 %v453, %v394
        %v524 = vadd.f32 %v449, %v395
        %v525 = vadd.f32 %v453, %v396
        %v526 = vmax.f32 %v462, 0.0
        %v527 = vmax.f32 %v463, 0.0
        %v528 = vmax.f32 %v464, 0.0
        %v529 = vmax.f32 %v465, 0.0
        %v530 = vmax.f32 %v466, 0.0
        %v531 = vmax.f32 %v467, 0.0
        %v532 = vmax.f32 %v468, 0.0
        %v533 = vmax.f32 %v469, 0.0
        %v534 = vmax.f32 %v470, 0.0
        %v535 = vmax.f32 %v471, 0.0
        %v536 = vmax.f32 %v472, 0.0
        %v537 = vmax.f32 %v473, 0.0
        %v538 = vmax.f32 %v474, 0.0
        %v539 = vmax.f32 %v475, 0.0
        %v540 = vmax.f32 %v476, 0.0
        %v541 = vmax.f32 %v477, 0.0
        %v542 = vmax.f32 %v478, 0.0
        %v543 = vmax.f32 %v479, 0.0
        %v544 = vmax.f32 %v480, 0.0
        %v545 = vmax.f32 %v481, 0.0
        %v546 = vmax.f32 %v482, 0.0
        %v547 = vmax.f32 %v483, 0.0
        %v548 = vmax.f32 %v484, 0.0
        %v549 = vmax.f32 %v485, 0.0
        %v550 = vmax.f32 %v486, 0.0
        %v551 = vmax.f32 %v487, 0.0
        %v552 = vmax.f32 %v488, 0.0
        %v553 = vmax.f32 %v489, 0.0
        %v554 = vmax.f32 %v490, 0.0
        %v555 = vmax.f32 %v491, 0.0
        %v556 = vmax.f32 %v492, 0.0
        %v557 = vmax.f32 %v493, 0.0
        %v558 = vmax.f32 %v494, 0.0
        %v559 = vmax.f32 %v495, 0.0
        %v560 = vmax.f32 %v496, 0.0
        %v561 = vmax.f32 %v497, 0.0
        %v562 = vmax.f32 %v498, 0.0
        %v563 = vmax.f32 %v499, 0.0
        %v564 = vmax.f32 %v500, 0.0
        %v565 = vmax.f32 %v501, 0.0
        %v566 = vmax.f32 %v502, 0.0
        %v567 = vmax.f32 %v503, 0.0
        %v568 = vmax.f32 %v504, 0.0
        %v569 = vmax.f32 %v505, 0.0
        %v570 = vmax.f32 %v506, 0.0
        %v571 = vmax.f32 %v507, 0.0
        %v572 = vmax.f32 %v508, 0.0
        %v573 = vmax.f32 %v509, 0.0
        %v574 = vmax.f32 %v510, 0.0
        %v575 = vmax.f32 %v511, 0.0
        %v576 = vmax.f32 %v512, 0.0
        %v577 = vmax.f32 %v513, 0.0
        %v578 = vmax.f32 %v514, 0.0
        %v579 = vmax.f32 %v515, 0.0
        %v580 = vmax.f32 %v516, 0.0
        %v581 = vmax.f32 %v517, 0.0
        %v582 = vmax.f32 %v518, 0.0
        %v583 = vmax.f32 %v519, 0.0
        %v584 = vmax.f32 %v520, 0.0
        %v585 = vmax.f32 %v521, 0.0
        %v586 = vmax.f32 %v522, 0.0
        %v587 = vmax.f32 %v523, 0.0
        %v588 = vmax.f32 %v524, 0.0
        %v589 = vmax.f32 %v525, 0.0
        %v590 = vld [vmem:[#allocation7] sm:$0xff]
        %v591 = vld [vmem:[#allocation7 + $0x8] sm:$0xff]
        %v592 = vld [vmem:[#allocation7 + $0x10] sm:$0xff]
        %v593 = vld [vmem:[#allocation7 + $0x18] sm:$0xff]
        %v594 = vld [vmem:[#allocation7 + $0x20] sm:$0xff]
        %v595 = vld [vmem:[#allocation7 + $0x28] sm:$0xff]
        %v596 = vld [vmem:[#allocation7 + $0x30] sm:$0xff]
        %v597 = vld [vmem:[#allocation7 + $0x38] sm:$0xff]
        %v598 = vld [vmem:[#allocation7 + $0x40] sm:$0xff]
        %v599 = vld [vmem:[#allocation7 + $0x48] sm:$0xff]
        %v600 = vld [vmem:[#allocation7 + $0x50] sm:$0xff]
        %v601 = vld [vmem:[#allocation7 + $0x58] sm:$0xff]
        %v602 = vld [vmem:[#allocation7 + $0x60] sm:$0xff]
        %v603 = vld [vmem:[#allocation7 + $0x68] sm:$0xff]
        %v604 = vld [vmem:[#allocation7 + $0x70] sm:$0xff]
        %v605 = vld [vmem:[#allocation7 + $0x78] sm:$0xff]
        %v606 = vld [vmem:[#allocation7 + $0x80] sm:$0xff]
        %v607 = vld [vmem:[#allocation7 + $0x88] sm:$0xff]
        %v608 = vld [vmem:[#allocation7 + $0x90] sm:$0xff]
        %v609 = vld [vmem:[#allocation7 + $0x98] sm:$0xff]
        %v610 = vld [vmem:[#allocation7 + $0xa0] sm:$0xff]
        %v611 = vld [vmem:[#allocation7 + $0xa8] sm:$0xff]
        %v612 = vld [vmem:[#allocation7 + $0xb0] sm:$0xff]
        %v613 = vld [vmem:[#allocation7 + $0xb8] sm:$0xff]
        %v614 = vld [vmem:[#allocation7 + $0xc0] sm:$0xff]
        %v615 = vld [vmem:[#allocation7 + $0xc8] sm:$0xff]
        %v616 = vld [vmem:[#allocation7 + $0xd0] sm:$0xff]
        %v617 = vld [vmem:[#allocation7 + $0xd8] sm:$0xff]
        %v618 = vld [vmem:[#allocation7 + $0xe0] sm:$0xff]
        %v619 = vld [vmem:[#allocation7 + $0xe8] sm:$0xff]
        %v620 = vld [vmem:[#allocation7 + $0xf0] sm:$0xff]
        %v621 = vld [vmem:[#allocation7 + $0xf8] sm:$0xff]
        %v622 = vld [vmem:[#allocation7 + $0x100] sm:$0xff]
        %v623 = vld [vmem:[#allocation7 + $0x108] sm:$0xff]
        %v624 = vld [vmem:[#allocation7 + $0x110] sm:$0xff]
        %v625 = vld [vmem:[#allocation7 + $0x118] sm:$0xff]
        %v626 = vld [vmem:[#allocation7 + $0x120] sm:$0xff]
        %v627 = vld [vmem:[#allocation7 + $0x128] sm:$0xff]
        %v628 = vld [vmem:[#allocation7 + $0x130] sm:$0xff]
        %v629 = vld [vmem:[#allocation7 + $0x138] sm:$0xff]
        %v630 = vld [vmem:[#allocation7 + $0x140] sm:$0xff]
        %v631 = vld [vmem:[#allocation7 + $0x148] sm:$0xff]
        %v632 = vld [vmem:[#allocation7 + $0x150] sm:$0xff]
        %v633 = vld [vmem:[#allocation7 + $0x158] sm:$0xff]
        %v634 = vld [vmem:[#allocation7 + $0x160] sm:$0xff]
        %v635 = vld [vmem:[#allocation7 + $0x168] sm:$0xff]
        %v636 = vld [vmem:[#allocation7 + $0x170] sm:$0xff]
        %v637 = vld [vmem:[#allocation7 + $0x178] sm:$0xff]
        %v638 = vld [vmem:[#allocation7 + $0x180] sm:$0xff]
        %v639 = vld [vmem:[#allocation7 + $0x188] sm:$0xff]
        %v640 = vld [vmem:[#allocation7 + $0x190] sm:$0xff]
        %v641 = vld [vmem:[#allocation7 + $0x198] sm:$0xff]
        %v642 = vld [vmem:[#allocation7 + $0x1a0] sm:$0xff]
        %v643 = vld [vmem:[#allocation7 + $0x1a8] sm:$0xff]
        %v644 = vld [vmem:[#allocation7 + $0x1b0] sm:$0xff]
        %v645 = vld [vmem:[#allocation7 + $0x1b8] sm:$0xff]
        %v646 = vld [vmem:[#allocation7 + $0x1c0] sm:$0xff]
        %v647 = vld [vmem:[#allocation7 + $0x1c8] sm:$0xff]
        %v648 = vld [vmem:[#allocation7 + $0x1d0] sm:$0xff]
        %v649 = vld [vmem:[#allocation7 + $0x1d8] sm:$0xff]
        %v650 = vld [vmem:[#allocation7 + $0x1e0] sm:$0xff]
        %v651 = vld [vmem:[#allocation7 + $0x1e8] sm:$0xff]
        %v652 = vld [vmem:[#allocation7 + $0x1f0] sm:$0xff]
        %v653 = vld [vmem:[#allocation7 + $0x1f8] sm:$0xff]
        %v654 = vld [vmem:[%s3] sm:$0x3]
        %v656 = vlaneseq
        %v657 = vshrl.u32 %v656, 7
        %v658 = vsub.s32 0, %v657
        %v659 = vrot.slane %v654, %v658
        %v660 = vlaneseq
        %v661 = vshrl.u32 %v660, 7
        %v662 = vsub.s32 1, %v661
        %v663 = vrot.slane %v654, %v662
        %666 = vmatprep.subr.mxu0 %v621
        %667 = vmatpush1.msra.mxu0 %v620
        %668 = vmatprep.subr.mxu0 %v619
        %669 = vmatpush1.msra.mxu0 %v618
        %670 = vmatprep.subr.mxu0 %v617
        %671 = vmatpush1.msra.mxu0 %v616
        %672 = vmatprep.subr.mxu0 %v615
        %673 = vmatpush1.msra.mxu0 %v614
        %674 = vmatprep.subr.mxu0 %v613
        %675 = vmatpush1.msra.mxu0 %v612
        %676 = vmatprep.subr.mxu0 %v611
        %677 = vmatpush1.msra.mxu0 %v610
        %678 = vmatprep.subr.mxu0 %v609
        %679 = vmatpush1.msra.mxu0 %v608
        %680 = vmatprep.subr.mxu0 %v607
        %681 = vmatpush1.msra.mxu0 %v606
        %682 = vmatprep.subr.mxu0 %v605
        %683 = vmatpush1.msra.mxu0 %v604
        %684 = vmatprep.subr.mxu0 %v603
        %685 = vmatpush1.msra.mxu0 %v602
        %686 = vmatprep.subr.mxu0 %v601
        %687 = vmatpush1.msra.mxu0 %v600
        %688 = vmatprep.subr.mxu0 %v599
        %689 = vmatpush1.msra.mxu0 %v598
        %690 = vmatprep.subr.mxu0 %v597
        %691 = vmatpush1.msra.mxu0 %v596
        %692 = vmatprep.subr.mxu0 %v595
        %693 = vmatpush1.msra.mxu0 %v594
        %694 = vmatprep.subr.mxu0 %v593
        %695 = vmatpush1.msra.mxu0 %v592
        %696 = vmatprep.subr.mxu0 %v591
        %697 = vmatpush1.msra.mxu0 %v590
        %698 = vmatprep.subr.mxu0 %v653
        %699 = vmatpush2.msra.mxu0 %v652
        %700 = vmatprep.subr.mxu0 %v651
        %701 = vmatpush2.msra.mxu0 %v650
        %702 = vmatprep.subr.mxu0 %v649
        %703 = vmatpush2.msra.mxu0 %v648
        %704 = vmatprep.subr.mxu0 %v647
        %705 = vmatpush2.msra.mxu0 %v646
        %706 = vmatprep.subr.mxu0 %v645
        %707 = vmatpush2.msra.mxu0 %v644
        %708 = vmatprep.subr.mxu0 %v643
        %709 = vmatpush2.msra.mxu0 %v642
        %710 = vmatprep.subr.mxu0 %v641
        %711 = vmatpush2.msra.mxu0 %v640
        %712 = vmatprep.subr.mxu0 %v639
        %713 = vmatpush2.msra.mxu0 %v638
        %714 = vmatprep.subr.mxu0 %v637
        %715 = vmatpush2.msra.mxu0 %v636
        %716 = vmatprep.subr.mxu0 %v635
        %717 = vmatpush2.msra.mxu0 %v634
        %718 = vmatprep.subr.mxu0 %v633
        %719 = vmatpush2.msra.mxu0 %v632
        %720 = vmatprep.subr.mxu0 %v631
        %721 = vmatpush2.msra.mxu0 %v630
        %722 = vmatprep.subr.mxu0 %v629
        %723 = vmatpush2.msra.mxu0 %v628
        %724 = vmatprep.subr.mxu0 %v627
        %725 = vmatpush2.msra.mxu0 %v626
        %726 = vmatprep.subr.mxu0 %v625
        %727 = vmatpush2.msra.mxu0 %v624
        %728 = vmatprep.subr.mxu0 %v623
        %729 = vmatpush2.msra.mxu0 %v622
        %730 = vmatprep.mubr.f32.mxu0 %v527
        %731 = vmatmul.mubr.f32.gmra.mxu0 %v526
        %v732 = vpop.f32.mrf.mxu0
        %v733 = vadd.f32 %v659, %v732
        %v734 = vpop.f32.mrf.mxu0
        %v735 = vadd.f32 %v663, %v734
        %736 = vmatprep.mubr.f32.mxu0 %v529
        %737 = vmatmul.mubr.f32.gmra.mxu0 %v528
        %v738 = vpop.f32.mrf.mxu0
        %v739 = vadd.f32 %v659, %v738
        %v740 = vpop.f32.mrf.mxu0
        %v741 = vadd.f32 %v663, %v740
        %742 = vmatprep.mubr.f32.mxu0 %v531
        %743 = vmatmul.mubr.f32.gmra.mxu0 %v530
        %v744 = vpop.f32.mrf.mxu0
        %v745 = vadd.f32 %v659, %v744
        %v746 = vpop.f32.mrf.mxu0
        %v747 = vadd.f32 %v663, %v746
        %748 = vmatprep.mubr.f32.mxu0 %v533
        %749 = vmatmul.mubr.f32.gmra.mxu0 %v532
        %v750 = vpop.f32.mrf.mxu0
        %v751 = vadd.f32 %v659, %v750
        %v752 = vpop.f32.mrf.mxu0
        %v753 = vadd.f32 %v663, %v752
        %754 = vmatprep.mubr.f32.mxu0 %v535
        %755 = vmatmul.mubr.f32.gmra.mxu0 %v534
        %v756 = vpop.f32.mrf.mxu0
        %v757 = vadd.f32 %v659, %v756
        %v758 = vpop.f32.mrf.mxu0
        %v759 = vadd.f32 %v663, %v758
        %760 = vmatprep.mubr.f32.mxu0 %v537
        %761 = vmatmul.mubr.f32.gmra.mxu0 %v536
        %v762 = vpop.f32.mrf.mxu0
        %v763 = vadd.f32 %v659, %v762
        %v764 = vpop.f32.mrf.mxu0
        %v765 = vadd.f32 %v663, %v764
        %766 = vmatprep.mubr.f32.mxu0 %v539
        %767 = vmatmul.mubr.f32.gmra.mxu0 %v538
        %v768 = vpop.f32.mrf.mxu0
        %v769 = vadd.f32 %v659, %v768
        %v770 = vpop.f32.mrf.mxu0
        %v771 = vadd.f32 %v663, %v770
        %772 = vmatprep.mubr.f32.mxu0 %v541
        %773 = vmatmul.mubr.f32.gmra.mxu0 %v540
        %v774 = vpop.f32.mrf.mxu0
        %v775 = vadd.f32 %v659, %v774
        %v776 = vpop.f32.mrf.mxu0
        %v777 = vadd.f32 %v663, %v776
        %778 = vmatprep.mubr.f32.mxu0 %v543
        %779 = vmatmul.mubr.f32.gmra.mxu0 %v542
        %v780 = vpop.f32.mrf.mxu0
        %v781 = vadd.f32 %v659, %v780
        %v782 = vpop.f32.mrf.mxu0
        %v783 = vadd.f32 %v663, %v782
        %784 = vmatprep.mubr.f32.mxu0 %v545
        %785 = vmatmul.mubr.f32.gmra.mxu0 %v544
        %v786 = vpop.f32.mrf.mxu0
        %v787 = vadd.f32 %v659, %v786
        %v788 = vpop.f32.mrf.mxu0
        %v789 = vadd.f32 %v663, %v788
        %790 = vmatprep.mubr.f32.mxu0 %v547
        %791 = vmatmul.mubr.f32.gmra.mxu0 %v546
        %v792 = vpop.f32.mrf.mxu0
        %v793 = vadd.f32 %v659, %v792
        %v794 = vpop.f32.mrf.mxu0
        %v795 = vadd.f32 %v663, %v794
        %796 = vmatprep.mubr.f32.mxu0 %v549
        %797 = vmatmul.mubr.f32.gmra.mxu0 %v548
        %v798 = vpop.f32.mrf.mxu0
        %v799 = vadd.f32 %v659, %v798
        %v800 = vpop.f32.mrf.mxu0
        %v801 = vadd.f32 %v663, %v800
        %802 = vmatprep.mubr.f32.mxu0 %v551
        %803 = vmatmul.mubr.f32.gmra.mxu0 %v550
        %v804 = vpop.f32.mrf.mxu0
        %v805 = vadd.f32 %v659, %v804
        %v806 = vpop.f32.mrf.mxu0
        %v807 = vadd.f32 %v663, %v806
        %808 = vmatprep.mubr.f32.mxu0 %v553
        %809 = vmatmul.mubr.f32.gmra.mxu0 %v552
        %v810 = vpop.f32.mrf.mxu0
        %v811 = vadd.f32 %v659, %v810
        %v812 = vpop.f32.mrf.mxu0
        %v813 = vadd.f32 %v663, %v812
        %814 = vmatprep.mubr.f32.mxu0 %v555
        %815 = vmatmul.mubr.f32.gmra.mxu0 %v554
        %v816 = vpop.f32.mrf.mxu0
        %v817 = vadd.f32 %v659, %v816
        %v818 = vpop.f32.mrf.mxu0
        %v819 = vadd.f32 %v663, %v818
        %820 = vmatprep.mubr.f32.mxu0 %v557
        %821 = vmatmul.mubr.f32.gmra.mxu0 %v556
        %v822 = vpop.f32.mrf.mxu0
        %v823 = vadd.f32 %v659, %v822
        %v824 = vpop.f32.mrf.mxu0
        %v825 = vadd.f32 %v663, %v824
        %826 = vmatprep.mubr.f32.mxu0 %v559
        %827 = vmatmul.mubr.f32.gmra.mxu0 %v558
        %v828 = vpop.f32.mrf.mxu0
        %v829 = vadd.f32 %v659, %v828
        %v830 = vpop.f32.mrf.mxu0
        %v831 = vadd.f32 %v663, %v830
        %832 = vmatprep.mubr.f32.mxu0 %v561
        %833 = vmatmul.mubr.f32.gmra.mxu0 %v560
        %v834 = vpop.f32.mrf.mxu0
        %v835 = vadd.f32 %v659, %v834
        %v836 = vpop.f32.mrf.mxu0
        %v837 = vadd.f32 %v663, %v836
        %838 = vmatprep.mubr.f32.mxu0 %v563
        %839 = vmatmul.mubr.f32.gmra.mxu0 %v562
        %v840 = vpop.f32.mrf.mxu0
        %v841 = vadd.f32 %v659, %v840
        %v842 = vpop.f32.mrf.mxu0
        %v843 = vadd.f32 %v663, %v842
        %844 = vmatprep.mubr.f32.mxu0 %v565
        %845 = vmatmul.mubr.f32.gmra.mxu0 %v564
        %v846 = vpop.f32.mrf.mxu0
        %v847 = vadd.f32 %v659, %v846
        %v848 = vpop.f32.mrf.mxu0
        %v849 = vadd.f32 %v663, %v848
        %850 = vmatprep.mubr.f32.mxu0 %v567
        %851 = vmatmul.mubr.f32.gmra.mxu0 %v566
        %v852 = vpop.f32.mrf.mxu0
        %v853 = vadd.f32 %v659, %v852
        %v854 = vpop.f32.mrf.mxu0
        %v855 = vadd.f32 %v663, %v854
        %856 = vmatprep.mubr.f32.mxu0 %v569
        %857 = vmatmul.mubr.f32.gmra.mxu0 %v568
        %v858 = vpop.f32.mrf.mxu0
        %v859 = vadd.f32 %v659, %v858
        %v860 = vpop.f32.mrf.mxu0
        %v861 = vadd.f32 %v663, %v860
        %862 = vmatprep.mubr.f32.mxu0 %v571
        %863 = vmatmul.mubr.f32.gmra.mxu0 %v570
        %v864 = vpop.f32.mrf.mxu0
        %v865 = vadd.f32 %v659, %v864
        %v866 = vpop.f32.mrf.mxu0
        %v867 = vadd.f32 %v663, %v866
        %868 = vmatprep.mubr.f32.mxu0 %v573
        %869 = vmatmul.mubr.f32.gmra.mxu0 %v572
        %v870 = vpop.f32.mrf.mxu0
        %v871 = vadd.f32 %v659, %v870
        %v872 = vpop.f32.mrf.mxu0
        %v873 = vadd.f32 %v663, %v872
        %874 = vmatprep.mubr.f32.mxu0 %v575
        %875 = vmatmul.mubr.f32.gmra.mxu0 %v574
        %v876 = vpop.f32.mrf.mxu0
        %v877 = vadd.f32 %v659, %v876
        %v878 = vpop.f32.mrf.mxu0
        %v879 = vadd.f32 %v663, %v878
        %880 = vmatprep.mubr.f32.mxu0 %v577
        %881 = vmatmul.mubr.f32.gmra.mxu0 %v576
        %v882 = vpop.f32.mrf.mxu0
        %v883 = vadd.f32 %v659, %v882
        %v884 = vpop.f32.mrf.mxu0
        %v885 = vadd.f32 %v663, %v884
        %886 = vmatprep.mubr.f32.mxu0 %v579
        %887 = vmatmul.mubr.f32.gmra.mxu0 %v578
        %v888 = vpop.f32.mrf.mxu0
        %v889 = vadd.f32 %v659, %v888
        %v890 = vpop.f32.mrf.mxu0
        %v891 = vadd.f32 %v663, %v890
        %892 = vmatprep.mubr.f32.mxu0 %v581
        %893 = vmatmul.mubr.f32.gmra.mxu0 %v580
        %v894 = vpop.f32.mrf.mxu0
        %v895 = vadd.f32 %v659, %v894
        %v896 = vpop.f32.mrf.mxu0
        %v897 = vadd.f32 %v663, %v896
        %898 = vmatprep.mubr.f32.mxu0 %v583
        %899 = vmatmul.mubr.f32.gmra.mxu0 %v582
        %v900 = vpop.f32.mrf.mxu0
        %v901 = vadd.f32 %v659, %v900
        %v902 = vpop.f32.mrf.mxu0
        %v903 = vadd.f32 %v663, %v902
        %904 = vmatprep.mubr.f32.mxu0 %v585
        %905 = vmatmul.mubr.f32.gmra.mxu0 %v584
        %v906 = vpop.f32.mrf.mxu0
        %v907 = vadd.f32 %v659, %v906
        %v908 = vpop.f32.mrf.mxu0
        %v909 = vadd.f32 %v663, %v908
        %910 = vmatprep.mubr.f32.mxu0 %v587
        %911 = vmatmul.mubr.f32.gmra.mxu0 %v586
        %v912 = vpop.f32.mrf.mxu0
        %v913 = vadd.f32 %v659, %v912
        %v914 = vpop.f32.mrf.mxu0
        %v915 = vadd.f32 %v663, %v914
        %916 = vmatprep.mubr.f32.mxu0 %v589
        %917 = vmatmul.mubr.f32.gmra.mxu0 %v588
        %v918 = vpop.f32.mrf.mxu0
        %v919 = vadd.f32 %v659, %v918
        %v920 = vpop.f32.mrf.mxu0
        %v921 = vadd.f32 %v663, %v920
        %922 = vdwg.mxu0
        %v923 = vmax.f32 %v733, 0.0
        %v924 = vmax.f32 %v735, 0.0
        %v925 = vmax.f32 %v739, 0.0
        %v926 = vmax.f32 %v741, 0.0
        %v927 = vmax.f32 %v745, 0.0
        %v928 = vmax.f32 %v747, 0.0
        %v929 = vmax.f32 %v751, 0.0
        %v930 = vmax.f32 %v753, 0.0
        %v931 = vmax.f32 %v757, 0.0
        %v932 = vmax.f32 %v759, 0.0
        %v933 = vmax.f32 %v763, 0.0
        %v934 = vmax.f32 %v765, 0.0
        %v935 = vmax.f32 %v769, 0.0
        %v936 = vmax.f32 %v771, 0.0
        %v937 = vmax.f32 %v775, 0.0
        %v938 = vmax.f32 %v777, 0.0
        %v939 = vmax.f32 %v781, 0.0
        %v940 = vmax.f32 %v783, 0.0
        %v941 = vmax.f32 %v787, 0.0
        %v942 = vmax.f32 %v789, 0.0
        %v943 = vmax.f32 %v793, 0.0
        %v944 = vmax.f32 %v795, 0.0
        %v945 = vmax.f32 %v799, 0.0
        %v946 = vmax.f32 %v801, 0.0
        %v947 = vmax.f32 %v805, 0.0
        %v948 = vmax.f32 %v807, 0.0
        %v949 = vmax.f32 %v811, 0.0
        %v950 = vmax.f32 %v813, 0.0
        %v951 = vmax.f32 %v817, 0.0
        %v952 = vmax.f32 %v819, 0.0
        %v953 = vmax.f32 %v823, 0.0
        %v954 = vmax.f32 %v825, 0.0
        %v955 = vmax.f32 %v829, 0.0
        %v956 = vmax.f32 %v831, 0.0
        %v957 = vmax.f32 %v835, 0.0
        %v958 = vmax.f32 %v837, 0.0
        %v959 = vmax.f32 %v841, 0.0
        %v960 = vmax.f32 %v843, 0.0
        %v961 = vmax.f32 %v847, 0.0
        %v962 = vmax.f32 %v849, 0.0
        %v963 = vmax.f32 %v853, 0.0
        %v964 = vmax.f32 %v855, 0.0
        %v965 = vmax.f32 %v859, 0.0
        %v966 = vmax.f32 %v861, 0.0
        %v967 = vmax.f32 %v865, 0.0
        %v968 = vmax.f32 %v867, 0.0
        %v969 = vmax.f32 %v871, 0.0
        %v970 = vmax.f32 %v873, 0.0
        %v971 = vmax.f32 %v877, 0.0
        %v972 = vmax.f32 %v879, 0.0
        %v973 = vmax.f32 %v883, 0.0
        %v974 = vmax.f32 %v885, 0.0
        %v975 = vmax.f32 %v889, 0.0
        %v976 = vmax.f32 %v891, 0.0
        %v977 = vmax.f32 %v895, 0.0
        %v978 = vmax.f32 %v897, 0.0
        %v979 = vmax.f32 %v901, 0.0
        %v980 = vmax.f32 %v903, 0.0
        %v981 = vmax.f32 %v907, 0.0
        %v982 = vmax.f32 %v909, 0.0
        %v983 = vmax.f32 %v913, 0.0
        %v984 = vmax.f32 %v915, 0.0
        %v985 = vmax.f32 %v919, 0.0
        %v986 = vmax.f32 %v921, 0.0
        %v987 = vld [vmem:[#allocation8] sm:$0xff]
        %v988 = vld [vmem:[#allocation8 + $0x8] sm:$0xff]
        %v989 = vld [vmem:[#allocation8 + $0x10] sm:$0xff]
        %v990 = vld [vmem:[#allocation8 + $0x18] sm:$0xff]
        %v991 = vld [vmem:[#allocation8 + $0x20] sm:$0xff]
        %v992 = vld [vmem:[#allocation8 + $0x28] sm:$0xff]
        %v993 = vld [vmem:[#allocation8 + $0x30] sm:$0xff]
        %v994 = vld [vmem:[#allocation8 + $0x38] sm:$0xff]
        %v995 = vld [vmem:[#allocation8 + $0x40] sm:$0xff]
        %v996 = vld [vmem:[#allocation8 + $0x48] sm:$0xff]
        %v997 = vld [vmem:[#allocation8 + $0x50] sm:$0xff]
        %v998 = vld [vmem:[#allocation8 + $0x58] sm:$0xff]
        %v999 = vld [vmem:[#allocation8 + $0x60] sm:$0xff]
        %v1000 = vld [vmem:[#allocation8 + $0x68] sm:$0xff]
        %v1001 = vld [vmem:[#allocation8 + $0x70] sm:$0xff]
        %v1002 = vld [vmem:[#allocation8 + $0x78] sm:$0xff]
        %v1003 = vld [vmem:[#allocation8 + $0x80] sm:$0xff]
        %v1004 = vld [vmem:[#allocation8 + $0x88] sm:$0xff]
        %v1005 = vld [vmem:[#allocation8 + $0x90] sm:$0xff]
        %v1006 = vld [vmem:[#allocation8 + $0x98] sm:$0xff]
        %v1007 = vld [vmem:[#allocation8 + $0xa0] sm:$0xff]
        %v1008 = vld [vmem:[#allocation8 + $0xa8] sm:$0xff]
        %v1009 = vld [vmem:[#allocation8 + $0xb0] sm:$0xff]
        %v1010 = vld [vmem:[#allocation8 + $0xb8] sm:$0xff]
        %v1011 = vld [vmem:[#allocation8 + $0xc0] sm:$0xff]
        %v1012 = vld [vmem:[#allocation8 + $0xc8] sm:$0xff]
        %v1013 = vld [vmem:[#allocation8 + $0xd0] sm:$0xff]
        %v1014 = vld [vmem:[#allocation8 + $0xd8] sm:$0xff]
        %v1015 = vld [vmem:[#allocation8 + $0xe0] sm:$0xff]
        %v1016 = vld [vmem:[#allocation8 + $0xe8] sm:$0xff]
        %v1017 = vld [vmem:[#allocation8 + $0xf0] sm:$0xff]
        %v1018 = vld [vmem:[#allocation8 + $0xf8] sm:$0xff]
        %v1019 = vld [vmem:[#allocation8 + $0x100] sm:$0xff]
        %v1020 = vld [vmem:[#allocation8 + $0x108] sm:$0xff]
        %v1021 = vld [vmem:[#allocation8 + $0x110] sm:$0xff]
        %v1022 = vld [vmem:[#allocation8 + $0x118] sm:$0xff]
        %v1023 = vld [vmem:[#allocation8 + $0x120] sm:$0xff]
        %v1024 = vld [vmem:[#allocation8 + $0x128] sm:$0xff]
        %v1025 = vld [vmem:[#allocation8 + $0x130] sm:$0xff]
        %v1026 = vld [vmem:[#allocation8 + $0x138] sm:$0xff]
        %v1027 = vld [vmem:[#allocation8 + $0x140] sm:$0xff]
        %v1028 = vld [vmem:[#allocation8 + $0x148] sm:$0xff]
        %v1029 = vld [vmem:[#allocation8 + $0x150] sm:$0xff]
        %v1030 = vld [vmem:[#allocation8 + $0x158] sm:$0xff]
        %v1031 = vld [vmem:[#allocation8 + $0x160] sm:$0xff]
        %v1032 = vld [vmem:[#allocation8 + $0x168] sm:$0xff]
        %v1033 = vld [vmem:[#allocation8 + $0x170] sm:$0xff]
        %v1034 = vld [vmem:[#allocation8 + $0x178] sm:$0xff]
        %v1035 = vld [vmem:[#allocation8 + $0x180] sm:$0xff]
        %v1036 = vld [vmem:[#allocation8 + $0x188] sm:$0xff]
        %v1037 = vld [vmem:[#allocation8 + $0x190] sm:$0xff]
        %v1038 = vld [vmem:[#allocation8 + $0x198] sm:$0xff]
        %v1039 = vld [vmem:[#allocation8 + $0x1a0] sm:$0xff]
        %v1040 = vld [vmem:[#allocation8 + $0x1a8] sm:$0xff]
        %v1041 = vld [vmem:[#allocation8 + $0x1b0] sm:$0xff]
        %v1042 = vld [vmem:[#allocation8 + $0x1b8] sm:$0xff]
        %v1043 = vld [vmem:[#allocation8 + $0x1c0] sm:$0xff]
        %v1044 = vld [vmem:[#allocation8 + $0x1c8] sm:$0xff]
        %v1045 = vld [vmem:[#allocation8 + $0x1d0] sm:$0xff]
        %v1046 = vld [vmem:[#allocation8 + $0x1d8] sm:$0xff]
        %v1047 = vld [vmem:[#allocation8 + $0x1e0] sm:$0xff]
        %v1048 = vld [vmem:[#allocation8 + $0x1e8] sm:$0xff]
        %v1049 = vld [vmem:[#allocation8 + $0x1f0] sm:$0xff]
        %v1050 = vld [vmem:[#allocation8 + $0x1f8] sm:$0xff]
        %v1051 = vld [vmem:[%s5] sm:$0x3]
        %v1053 = vlaneseq
        %v1054 = vshrl.u32 %v1053, 7
        %v1055 = vsub.s32 0, %v1054
        %v1056 = vrot.slane %v1051, %v1055
        %v1057 = vlaneseq
        %v1058 = vshrl.u32 %v1057, 7
        %v1059 = vsub.s32 1, %v1058
        %v1060 = vrot.slane %v1051, %v1059
        %1063 = vmatprep.subr.mxu0 %v1018
        %1064 = vmatpush1.msra.mxu0 %v1017
        %1065 = vmatprep.subr.mxu0 %v1016
        %1066 = vmatpush1.msra.mxu0 %v1015
        %1067 = vmatprep.subr.mxu0 %v1014
        %1068 = vmatpush1.msra.mxu0 %v1013
        %1069 = vmatprep.subr.mxu0 %v1012
        %1070 = vmatpush1.msra.mxu0 %v1011
        %1071 = vmatprep.subr.mxu0 %v1010
        %1072 = vmatpush1.msra.mxu0 %v1009
        %1073 = vmatprep.subr.mxu0 %v1008
        %1074 = vmatpush1.msra.mxu0 %v1007
        %1075 = vmatprep.subr.mxu0 %v1006
        %1076 = vmatpush1.msra.mxu0 %v1005
        %1077 = vmatprep.subr.mxu0 %v1004
        %1078 = vmatpush1.msra.mxu0 %v1003
        %1079 = vmatprep.subr.mxu0 %v1002
        %1080 = vmatpush1.msra.mxu0 %v1001
        %1081 = vmatprep.subr.mxu0 %v1000
        %1082 = vmatpush1.msra.mxu0 %v999
        %1083 = vmatprep.subr.mxu0 %v998
        %1084 = vmatpush1.msra.mxu0 %v997
        %1085 = vmatprep.subr.mxu0 %v996
        %1086 = vmatpush1.msra.mxu0 %v995
        %1087 = vmatprep.subr.mxu0 %v994
        %1088 = vmatpush1.msra.mxu0 %v993
        %1089 = vmatprep.subr.mxu0 %v992
        %1090 = vmatpush1.msra.mxu0 %v991
        %1091 = vmatprep.subr.mxu0 %v990
        %1092 = vmatpush1.msra.mxu0 %v989
        %1093 = vmatprep.subr.mxu0 %v988
        %1094 = vmatpush1.msra.mxu0 %v987
        %1095 = vmatprep.subr.mxu0 %v1050
        %1096 = vmatpush2.msra.mxu0 %v1049
        %1097 = vmatprep.subr.mxu0 %v1048
        %1098 = vmatpush2.msra.mxu0 %v1047
        %1099 = vmatprep.subr.mxu0 %v1046
        %1100 = vmatpush2.msra.mxu0 %v1045
        %1101 = vmatprep.subr.mxu0 %v1044
        %1102 = vmatpush2.msra.mxu0 %v1043
        %1103 = vmatprep.subr.mxu0 %v1042
        %1104 = vmatpush2.msra.mxu0 %v1041
        %1105 = vmatprep.subr.mxu0 %v1040
        %1106 = vmatpush2.msra.mxu0 %v1039
        %1107 = vmatprep.subr.mxu0 %v1038
        %1108 = vmatpush2.msra.mxu0 %v1037
        %1109 = vmatprep.subr.mxu0 %v1036
        %1110 = vmatpush2.msra.mxu0 %v1035
        %1111 = vmatprep.subr.mxu0 %v1034
        %1112 = vmatpush2.msra.mxu0 %v1033
        %1113 = vmatprep.subr.mxu0 %v1032
        %1114 = vmatpush2.msra.mxu0 %v1031
        %1115 = vmatprep.subr.mxu0 %v1030
        %1116 = vmatpush2.msra.mxu0 %v1029
        %1117 = vmatprep.subr.mxu0 %v1028
        %1118 = vmatpush2.msra.mxu0 %v1027
        %1119 = vmatprep.subr.mxu0 %v1026
        %1120 = vmatpush2.msra.mxu0 %v1025
        %1121 = vmatprep.subr.mxu0 %v1024
        %1122 = vmatpush2.msra.mxu0 %v1023
        %1123 = vmatprep.subr.mxu0 %v1022
        %1124 = vmatpush2.msra.mxu0 %v1021
        %1125 = vmatprep.subr.mxu0 %v1020
        %1126 = vmatpush2.msra.mxu0 %v1019
        %1127 = vmatprep.mubr.f32.mxu0 %v924
        %1128 = vmatmul.mubr.f32.gmra.mxu0 %v923
        %v1129 = vpop.f32.mrf.mxu0
        %v1130 = vadd.f32 %v1056, %v1129
        %v1131 = vpop.f32.mrf.mxu0
        %v1132 = vadd.f32 %v1060, %v1131
        %1133 = vmatprep.mubr.f32.mxu0 %v926
        %1134 = vmatmul.mubr.f32.gmra.mxu0 %v925
        %v1135 = vpop.f32.mrf.mxu0
        %v1136 = vadd.f32 %v1056, %v1135
        %v1137 = vpop.f32.mrf.mxu0
        %v1138 = vadd.f32 %v1060, %v1137
        %1139 = vmatprep.mubr.f32.mxu0 %v928
        %1140 = vmatmul.mubr.f32.gmra.mxu0 %v927
        %v1141 = vpop.f32.mrf.mxu0
        %v1142 = vadd.f32 %v1056, %v1141
        %v1143 = vpop.f32.mrf.mxu0
        %v1144 = vadd.f32 %v1060, %v1143
        %1145 = vmatprep.mubr.f32.mxu0 %v930
        %1146 = vmatmul.mubr.f32.gmra.mxu0 %v929
        %v1147 = vpop.f32.mrf.mxu0
        %v1148 = vadd.f32 %v1056, %v1147
        %v1149 = vpop.f32.mrf.mxu0
        %v1150 = vadd.f32 %v1060, %v1149
        %1151 = vmatprep.mubr.f32.mxu0 %v932
        %1152 = vmatmul.mubr.f32.gmra.mxu0 %v931
        %v1153 = vpop.f32.mrf.mxu0
        %v1154 = vadd.f32 %v1056, %v1153
        %v1155 = vpop.f32.mrf.mxu0
        %v1156 = vadd.f32 %v1060, %v1155
        %1157 = vmatprep.mubr.f32.mxu0 %v934
        %1158 = vmatmul.mubr.f32.gmra.mxu0 %v933
        %v1159 = vpop.f32.mrf.mxu0
        %v1160 = vadd.f32 %v1056, %v1159
        %v1161 = vpop.f32.mrf.mxu0
        %v1162 = vadd.f32 %v1060, %v1161
        %1163 = vmatprep.mubr.f32.mxu0 %v936
        %1164 = vmatmul.mubr.f32.gmra.mxu0 %v935
        %v1165 = vpop.f32.mrf.mxu0
        %v1166 = vadd.f32 %v1056, %v1165
        %v1167 = vpop.f32.mrf.mxu0
        %v1168 = vadd.f32 %v1060, %v1167
        %1169 = vmatprep.mubr.f32.mxu0 %v938
        %1170 = vmatmul.mubr.f32.gmra.mxu0 %v937
        %v1171 = vpop.f32.mrf.mxu0
        %v1172 = vadd.f32 %v1056, %v1171
        %v1173 = vpop.f32.mrf.mxu0
        %v1174 = vadd.f32 %v1060, %v1173
        %1175 = vmatprep.mubr.f32.mxu0 %v940
        %1176 = vmatmul.mubr.f32.gmra.mxu0 %v939
        %v1177 = vpop.f32.mrf.mxu0
        %v1178 = vadd.f32 %v1056, %v1177
        %v1179 = vpop.f32.mrf.mxu0
        %v1180 = vadd.f32 %v1060, %v1179
        %1181 = vmatprep.mubr.f32.mxu0 %v942
        %1182 = vmatmul.mubr.f32.gmra.mxu0 %v941
        %v1183 = vpop.f32.mrf.mxu0
        %v1184 = vadd.f32 %v1056, %v1183
        %v1185 = vpop.f32.mrf.mxu0
        %v1186 = vadd.f32 %v1060, %v1185
        %1187 = vmatprep.mubr.f32.mxu0 %v944
        %1188 = vmatmul.mubr.f32.gmra.mxu0 %v943
        %v1189 = vpop.f32.mrf.mxu0
        %v1190 = vadd.f32 %v1056, %v1189
        %v1191 = vpop.f32.mrf.mxu0
        %v1192 = vadd.f32 %v1060, %v1191
        %1193 = vmatprep.mubr.f32.mxu0 %v946
        %1194 = vmatmul.mubr.f32.gmra.mxu0 %v945
        %v1195 = vpop.f32.mrf.mxu0
        %v1196 = vadd.f32 %v1056, %v1195
        %v1197 = vpop.f32.mrf.mxu0
        %v1198 = vadd.f32 %v1060, %v1197
        %1199 = vmatprep.mubr.f32.mxu0 %v948
        %1200 = vmatmul.mubr.f32.gmra.mxu0 %v947
        %v1201 = vpop.f32.mrf.mxu0
        %v1202 = vadd.f32 %v1056, %v1201
        %v1203 = vpop.f32.mrf.mxu0
        %v1204 = vadd.f32 %v1060, %v1203
        %1205 = vmatprep.mubr.f32.mxu0 %v950
        %1206 = vmatmul.mubr.f32.gmra.mxu0 %v949
        %v1207 = vpop.f32.mrf.mxu0
        %v1208 = vadd.f32 %v1056, %v1207
        %v1209 = vpop.f32.mrf.mxu0
        %v1210 = vadd.f32 %v1060, %v1209
        %1211 = vmatprep.mubr.f32.mxu0 %v952
        %1212 = vmatmul.mubr.f32.gmra.mxu0 %v951
        %v1213 = vpop.f32.mrf.mxu0
        %v1214 = vadd.f32 %v1056, %v1213
        %v1215 = vpop.f32.mrf.mxu0
        %v1216 = vadd.f32 %v1060, %v1215
        %1217 = vmatprep.mubr.f32.mxu0 %v954
        %1218 = vmatmul.mubr.f32.gmra.mxu0 %v953
        %v1219 = vpop.f32.mrf.mxu0
        %v1220 = vadd.f32 %v1056, %v1219
        %v1221 = vpop.f32.mrf.mxu0
        %v1222 = vadd.f32 %v1060, %v1221
        %1223 = vmatprep.mubr.f32.mxu0 %v956
        %1224 = vmatmul.mubr.f32.gmra.mxu0 %v955
        %v1225 = vpop.f32.mrf.mxu0
        %v1226 = vadd.f32 %v1056, %v1225
        %v1227 = vpop.f32.mrf.mxu0
        %v1228 = vadd.f32 %v1060, %v1227
        %1229 = vmatprep.mubr.f32.mxu0 %v958
        %1230 = vmatmul.mubr.f32.gmra.mxu0 %v957
        %v1231 = vpop.f32.mrf.mxu0
        %v1232 = vadd.f32 %v1056, %v1231
        %v1233 = vpop.f32.mrf.mxu0
        %v1234 = vadd.f32 %v1060, %v1233
        %1235 = vmatprep.mubr.f32.mxu0 %v960
        %1236 = vmatmul.mubr.f32.gmra.mxu0 %v959
        %v1237 = vpop.f32.mrf.mxu0
        %v1238 = vadd.f32 %v1056, %v1237
        %v1239 = vpop.f32.mrf.mxu0
        %v1240 = vadd.f32 %v1060, %v1239
        %1241 = vmatprep.mubr.f32.mxu0 %v962
        %1242 = vmatmul.mubr.f32.gmra.mxu0 %v961
        %v1243 = vpop.f32.mrf.mxu0
        %v1244 = vadd.f32 %v1056, %v1243
        %v1245 = vpop.f32.mrf.mxu0
        %v1246 = vadd.f32 %v1060, %v1245
        %1247 = vmatprep.mubr.f32.mxu0 %v964
        %1248 = vmatmul.mubr.f32.gmra.mxu0 %v963
        %v1249 = vpop.f32.mrf.mxu0
        %v1250 = vadd.f32 %v1056, %v1249
        %v1251 = vpop.f32.mrf.mxu0
        %v1252 = vadd.f32 %v1060, %v1251
        %1253 = vmatprep.mubr.f32.mxu0 %v966
        %1254 = vmatmul.mubr.f32.gmra.mxu0 %v965
        %v1255 = vpop.f32.mrf.mxu0
        %v1256 = vadd.f32 %v1056, %v1255
        %v1257 = vpop.f32.mrf.mxu0
        %v1258 = vadd.f32 %v1060, %v1257
        %1259 = vmatprep.mubr.f32.mxu0 %v968
        %1260 = vmatmul.mubr.f32.gmra.mxu0 %v967
        %v1261 = vpop.f32.mrf.mxu0
        %v1262 = vadd.f32 %v1056, %v1261
        %v1263 = vpop.f32.mrf.mxu0
        %v1264 = vadd.f32 %v1060, %v1263
        %1265 = vmatprep.mubr.f32.mxu0 %v970
        %1266 = vmatmul.mubr.f32.gmra.mxu0 %v969
        %v1267 = vpop.f32.mrf.mxu0
        %v1268 = vadd.f32 %v1056, %v1267
        %v1269 = vpop.f32.mrf.mxu0
        %v1270 = vadd.f32 %v1060, %v1269
        %1271 = vmatprep.mubr.f32.mxu0 %v972
        %1272 = vmatmul.mubr.f32.gmra.mxu0 %v971
        %v1273 = vpop.f32.mrf.mxu0
        %v1274 = vadd.f32 %v1056, %v1273
        %v1275 = vpop.f32.mrf.mxu0
        %v1276 = vadd.f32 %v1060, %v1275
        %1277 = vmatprep.mubr.f32.mxu0 %v974
        %1278 = vmatmul.mubr.f32.gmra.mxu0 %v973
        %v1279 = vpop.f32.mrf.mxu0
        %v1280 = vadd.f32 %v1056, %v1279
        %v1281 = vpop.f32.mrf.mxu0
        %v1282 = vadd.f32 %v1060, %v1281
        %1283 = vmatprep.mubr.f32.mxu0 %v976
        %1284 = vmatmul.mubr.f32.gmra.mxu0 %v975
        %v1285 = vpop.f32.mrf.mxu0
        %v1286 = vadd.f32 %v1056, %v1285
        %v1287 = vpop.f32.mrf.mxu0
        %v1288 = vadd.f32 %v1060, %v1287
        %1289 = vmatprep.mubr.f32.mxu0 %v978
        %1290 = vmatmul.mubr.f32.gmra.mxu0 %v977
        %v1291 = vpop.f32.mrf.mxu0
        %v1292 = vadd.f32 %v1056, %v1291
        %v1293 = vpop.f32.mrf.mxu0
        %v1294 = vadd.f32 %v1060, %v1293
        %1295 = vmatprep.mubr.f32.mxu0 %v980
        %1296 = vmatmul.mubr.f32.gmra.mxu0 %v979
        %v1297 = vpop.f32.mrf.mxu0
        %v1298 = vadd.f32 %v1056, %v1297
        %v1299 = vpop.f32.mrf.mxu0
        %v1300 = vadd.f32 %v1060, %v1299
        %1301 = vmatprep.mubr.f32.mxu0 %v982
        %1302 = vmatmul.mubr.f32.gmra.mxu0 %v981
        %v1303 = vpop.f32.mrf.mxu0
        %v1304 = vadd.f32 %v1056, %v1303
        %v1305 = vpop.f32.mrf.mxu0
        %v1306 = vadd.f32 %v1060, %v1305
        %1307 = vmatprep.mubr.f32.mxu0 %v984
        %1308 = vmatmul.mubr.f32.gmra.mxu0 %v983
        %v1309 = vpop.f32.mrf.mxu0
        %v1310 = vadd.f32 %v1056, %v1309
        %v1311 = vpop.f32.mrf.mxu0
        %v1312 = vadd.f32 %v1060, %v1311
        %1313 = vmatprep.mubr.f32.mxu0 %v986
        %1314 = vmatmul.mubr.f32.gmra.mxu0 %v985
        %v1315 = vpop.f32.mrf.mxu0
        %v1316 = vadd.f32 %v1056, %v1315
        %v1317 = vpop.f32.mrf.mxu0
        %v1318 = vadd.f32 %v1060, %v1317
        %1319 = vdwg.mxu0
        %v1320 = vmax.f32 %v1130, 0.0
        %v1321 = vmax.f32 %v1132, 0.0
        %v1322 = vmax.f32 %v1136, 0.0
        %v1323 = vmax.f32 %v1138, 0.0
        %v1324 = vmax.f32 %v1142, 0.0
        %v1325 = vmax.f32 %v1144, 0.0
        %v1326 = vmax.f32 %v1148, 0.0
        %v1327 = vmax.f32 %v1150, 0.0
        %v1328 = vmax.f32 %v1154, 0.0
        %v1329 = vmax.f32 %v1156, 0.0
        %v1330 = vmax.f32 %v1160, 0.0
        %v1331 = vmax.f32 %v1162, 0.0
        %v1332 = vmax.f32 %v1166, 0.0
        %v1333 = vmax.f32 %v1168, 0.0
        %v1334 = vmax.f32 %v1172, 0.0
        %v1335 = vmax.f32 %v1174, 0.0
        %v1336 = vmax.f32 %v1178, 0.0
        %v1337 = vmax.f32 %v1180, 0.0
        %v1338 = vmax.f32 %v1184, 0.0
        %v1339 = vmax.f32 %v1186, 0.0
        %v1340 = vmax.f32 %v1190, 0.0
        %v1341 = vmax.f32 %v1192, 0.0
        %v1342 = vmax.f32 %v1196, 0.0
        %v1343 = vmax.f32 %v1198, 0.0
        %v1344 = vmax.f32 %v1202, 0.0
        %v1345 = vmax.f32 %v1204, 0.0
        %v1346 = vmax.f32 %v1208, 0.0
        %v1347 = vmax.f32 %v1210, 0.0
        %v1348 = vmax.f32 %v1214, 0.0
        %v1349 = vmax.f32 %v1216, 0.0
        %v1350 = vmax.f32 %v1220, 0.0
        %v1351 = vmax.f32 %v1222, 0.0
        %v1352 = vmax.f32 %v1226, 0.0
        %v1353 = vmax.f32 %v1228, 0.0
        %v1354 = vmax.f32 %v1232, 0.0
        %v1355 = vmax.f32 %v1234, 0.0
        %v1356 = vmax.f32 %v1238, 0.0
        %v1357 = vmax.f32 %v1240, 0.0
        %v1358 = vmax.f32 %v1244, 0.0
        %v1359 = vmax.f32 %v1246, 0.0
        %v1360 = vmax.f32 %v1250, 0.0
        %v1361 = vmax.f32 %v1252, 0.0
        %v1362 = vmax.f32 %v1256, 0.0
        %v1363 = vmax.f32 %v1258, 0.0
        %v1364 = vmax.f32 %v1262, 0.0
        %v1365 = vmax.f32 %v1264, 0.0
        %v1366 = vmax.f32 %v1268, 0.0
        %v1367 = vmax.f32 %v1270, 0.0
        %v1368 = vmax.f32 %v1274, 0.0
        %v1369 = vmax.f32 %v1276, 0.0
        %v1370 = vmax.f32 %v1280, 0.0
        %v1371 = vmax.f32 %v1282, 0.0
        %v1372 = vmax.f32 %v1286, 0.0
        %v1373 = vmax.f32 %v1288, 0.0
        %v1374 = vmax.f32 %v1292, 0.0
        %v1375 = vmax.f32 %v1294, 0.0
        %v1376 = vmax.f32 %v1298, 0.0
        %v1377 = vmax.f32 %v1300, 0.0
        %v1378 = vmax.f32 %v1304, 0.0
        %v1379 = vmax.f32 %v1306, 0.0
        %v1380 = vmax.f32 %v1310, 0.0
        %v1381 = vmax.f32 %v1312, 0.0
        %v1382 = vmax.f32 %v1316, 0.0
        %v1383 = vmax.f32 %v1318, 0.0
        %v1384 = vld [vmem:[#allocation10] sm:$0xff]
        %v1385 = vld [vmem:[#allocation10 + $0x8] sm:$0xff]
        %v1386 = vld [vmem:[#allocation10 + $0x10] sm:$0xff]
        %v1387 = vld [vmem:[#allocation10 + $0x18] sm:$0xff]
        %v1388 = vld [vmem:[#allocation10 + $0x20] sm:$0xff]
        %v1389 = vld [vmem:[#allocation10 + $0x28] sm:$0xff]
        %v1390 = vld [vmem:[#allocation10 + $0x30] sm:$0xff]
        %v1391 = vld [vmem:[#allocation10 + $0x38] sm:$0xff]
        %v1392 = vld [vmem:[#allocation10 + $0x40] sm:$0xff]
        %v1393 = vld [vmem:[#allocation10 + $0x48] sm:$0xff]
        %v1394 = vld [vmem:[#allocation10 + $0x50] sm:$0xff]
        %v1395 = vld [vmem:[#allocation10 + $0x58] sm:$0xff]
        %v1396 = vld [vmem:[#allocation10 + $0x60] sm:$0xff]
        %v1397 = vld [vmem:[#allocation10 + $0x68] sm:$0xff]
        %v1398 = vld [vmem:[#allocation10 + $0x70] sm:$0xff]
        %v1399 = vld [vmem:[#allocation10 + $0x78] sm:$0xff]
        %v1400 = vld [vmem:[#allocation10 + $0x80] sm:$0xff]
        %v1401 = vld [vmem:[#allocation10 + $0x88] sm:$0xff]
        %v1402 = vld [vmem:[#allocation10 + $0x90] sm:$0xff]
        %v1403 = vld [vmem:[#allocation10 + $0x98] sm:$0xff]
        %v1404 = vld [vmem:[#allocation10 + $0xa0] sm:$0xff]
        %v1405 = vld [vmem:[#allocation10 + $0xa8] sm:$0xff]
        %v1406 = vld [vmem:[#allocation10 + $0xb0] sm:$0xff]
        %v1407 = vld [vmem:[#allocation10 + $0xb8] sm:$0xff]
        %v1408 = vld [vmem:[#allocation10 + $0xc0] sm:$0xff]
        %v1409 = vld [vmem:[#allocation10 + $0xc8] sm:$0xff]
        %v1410 = vld [vmem:[#allocation10 + $0xd0] sm:$0xff]
        %v1411 = vld [vmem:[#allocation10 + $0xd8] sm:$0xff]
        %v1412 = vld [vmem:[#allocation10 + $0xe0] sm:$0xff]
        %v1413 = vld [vmem:[#allocation10 + $0xe8] sm:$0xff]
        %v1414 = vld [vmem:[#allocation10 + $0xf0] sm:$0xff]
        %v1415 = vld [vmem:[#allocation10 + $0xf8] sm:$0xff]
        %v1416 = vld [vmem:[%s7] sm:$0x1]
        %v1418 = vlaneseq
        %v1419 = vshrl.u32 %v1418, 7
        %v1420 = vsub.s32 0, %v1419
        %v1421 = vrot.slane %v1416, %v1420
        %1423 = vmatprep.subr.mxu0 0.0
        %1424 = vmatpush1.msra.mxu0 %v1399
        %1425 = vmatprep.subr.mxu0 0.0
        %1426 = vmatpush1.msra.mxu0 %v1398
        %1427 = vmatprep.subr.mxu0 0.0
        %1428 = vmatpush1.msra.mxu0 %v1397
        %1429 = vmatprep.subr.mxu0 0.0
        %1430 = vmatpush1.msra.mxu0 %v1396
        %1431 = vmatprep.subr.mxu0 0.0
        %1432 = vmatpush1.msra.mxu0 %v1395
        %1433 = vmatprep.subr.mxu0 0.0
        %1434 = vmatpush1.msra.mxu0 %v1394
        %1435 = vmatprep.subr.mxu0 0.0
        %1436 = vmatpush1.msra.mxu0 %v1393
        %1437 = vmatprep.subr.mxu0 0.0
        %1438 = vmatpush1.msra.mxu0 %v1392
        %1439 = vmatprep.subr.mxu0 0.0
        %1440 = vmatpush1.msra.mxu0 %v1391
        %1441 = vmatprep.subr.mxu0 0.0
        %1442 = vmatpush1.msra.mxu0 %v1390
        %1443 = vmatprep.subr.mxu0 0.0
        %1444 = vmatpush1.msra.mxu0 %v1389
        %1445 = vmatprep.subr.mxu0 0.0
        %1446 = vmatpush1.msra.mxu0 %v1388
        %1447 = vmatprep.subr.mxu0 0.0
        %1448 = vmatpush1.msra.mxu0 %v1387
        %1449 = vmatprep.subr.mxu0 0.0
        %1450 = vmatpush1.msra.mxu0 %v1386
        %1451 = vmatprep.subr.mxu0 0.0
        %1452 = vmatpush1.msra.mxu0 %v1385
        %1453 = vmatprep.subr.mxu0 0.0
        %1454 = vmatpush1.msra.mxu0 %v1384
        %1455 = vmatprep.subr.mxu0 0.0
        %1456 = vmatpush2.msra.mxu0 %v1415
        %1457 = vmatprep.subr.mxu0 0.0
        %1458 = vmatpush2.msra.mxu0 %v1414
        %1459 = vmatprep.subr.mxu0 0.0
        %1460 = vmatpush2.msra.mxu0 %v1413
        %1461 = vmatprep.subr.mxu0 0.0
        %1462 = vmatpush2.msra.mxu0 %v1412
        %1463 = vmatprep.subr.mxu0 0.0
        %1464 = vmatpush2.msra.mxu0 %v1411
        %1465 = vmatprep.subr.mxu0 0.0
        %1466 = vmatpush2.msra.mxu0 %v1410
        %1467 = vmatprep.subr.mxu0 0.0
        %1468 = vmatpush2.msra.mxu0 %v1409
        %1469 = vmatprep.subr.mxu0 0.0
        %1470 = vmatpush2.msra.mxu0 %v1408
        %1471 = vmatprep.subr.mxu0 0.0
        %1472 = vmatpush2.msra.mxu0 %v1407
        %1473 = vmatprep.subr.mxu0 0.0
        %1474 = vmatpush2.msra.mxu0 %v1406
        %1475 = vmatprep.subr.mxu0 0.0
        %1476 = vmatpush2.msra.mxu0 %v1405
        %1477 = vmatprep.subr.mxu0 0.0
        %1478 = vmatpush2.msra.mxu0 %v1404
        %1479 = vmatprep.subr.mxu0 0.0
        %1480 = vmatpush2.msra.mxu0 %v1403
        %1481 = vmatprep.subr.mxu0 0.0
        %1482 = vmatpush2.msra.mxu0 %v1402
        %1483 = vmatprep.subr.mxu0 0.0
        %1484 = vmatpush2.msra.mxu0 %v1401
        %1485 = vmatprep.subr.mxu0 0.0
        %1486 = vmatpush2.msra.mxu0 %v1400
        %1487 = vmatprep.mubr.f32.mxu0 %v1321
        %1488 = vmatmul.mubr.f32.gmra.mxu0 %v1320
        %v1489 = vpop.f32.mrf.mxu0
        %v1490 = vadd.f32 %v1421, %v1489
        %v1491 = vpop.f32.mrf.mxu0
        %1492 = vmatprep.mubr.f32.mxu0 %v1323
        %1493 = vmatmul.mubr.f32.gmra.mxu0 %v1322
        %v1494 = vpop.f32.mrf.mxu0
        %v1495 = vadd.f32 %v1421, %v1494
        %v1496 = vpop.f32.mrf.mxu0
        %1497 = vmatprep.mubr.f32.mxu0 %v1325
        %1498 = vmatmul.mubr.f32.gmra.mxu0 %v1324
        %v1499 = vpop.f32.mrf.mxu0
        %v1500 = vadd.f32 %v1421, %v1499
        %v1501 = vpop.f32.mrf.mxu0
        %1502 = vmatprep.mubr.f32.mxu0 %v1327
        %1503 = vmatmul.mubr.f32.gmra.mxu0 %v1326
        %v1504 = vpop.f32.mrf.mxu0
        %v1505 = vadd.f32 %v1421, %v1504
        %v1506 = vpop.f32.mrf.mxu0
        %1507 = vmatprep.mubr.f32.mxu0 %v1329
        %1508 = vmatmul.mubr.f32.gmra.mxu0 %v1328
        %v1509 = vpop.f32.mrf.mxu0
        %v1510 = vadd.f32 %v1421, %v1509
        %v1511 = vpop.f32.mrf.mxu0
        %1512 = vmatprep.mubr.f32.mxu0 %v1331
        %1513 = vmatmul.mubr.f32.gmra.mxu0 %v1330
        %v1514 = vpop.f32.mrf.mxu0
        %v1515 = vadd.f32 %v1421, %v1514
        %v1516 = vpop.f32.mrf.mxu0
        %1517 = vmatprep.mubr.f32.mxu0 %v1333
        %1518 = vmatmul.mubr.f32.gmra.mxu0 %v1332
        %v1519 = vpop.f32.mrf.mxu0
        %v1520 = vadd.f32 %v1421, %v1519
        %v1521 = vpop.f32.mrf.mxu0
        %1522 = vmatprep.mubr.f32.mxu0 %v1335
        %1523 = vmatmul.mubr.f32.gmra.mxu0 %v1334
        %v1524 = vpop.f32.mrf.mxu0
        %v1525 = vadd.f32 %v1421, %v1524
        %v1526 = vpop.f32.mrf.mxu0
        %1527 = vmatprep.mubr.f32.mxu0 %v1337
        %1528 = vmatmul.mubr.f32.gmra.mxu0 %v1336
        %v1529 = vpop.f32.mrf.mxu0
        %v1530 = vadd.f32 %v1421, %v1529
        %v1531 = vpop.f32.mrf.mxu0
        %1532 = vmatprep.mubr.f32.mxu0 %v1339
        %1533 = vmatmul.mubr.f32.gmra.mxu0 %v1338
        %v1534 = vpop.f32.mrf.mxu0
        %v1535 = vadd.f32 %v1421, %v1534
        %v1536 = vpop.f32.mrf.mxu0
        %1537 = vmatprep.mubr.f32.mxu0 %v1341
        %1538 = vmatmul.mubr.f32.gmra.mxu0 %v1340
        %v1539 = vpop.f32.mrf.mxu0
        %v1540 = vadd.f32 %v1421, %v1539
        %v1541 = vpop.f32.mrf.mxu0
        %1542 = vmatprep.mubr.f32.mxu0 %v1343
        %1543 = vmatmul.mubr.f32.gmra.mxu0 %v1342
        %v1544 = vpop.f32.mrf.mxu0
        %v1545 = vadd.f32 %v1421, %v1544
        %v1546 = vpop.f32.mrf.mxu0
        %1547 = vmatprep.mubr.f32.mxu0 %v1345
        %1548 = vmatmul.mubr.f32.gmra.mxu0 %v1344
        %v1549 = vpop.f32.mrf.mxu0
        %v1550 = vadd.f32 %v1421, %v1549
        %v1551 = vpop.f32.mrf.mxu0
        %1552 = vmatprep.mubr.f32.mxu0 %v1347
        %1553 = vmatmul.mubr.f32.gmra.mxu0 %v1346
        %v1554 = vpop.f32.mrf.mxu0
        %v1555 = vadd.f32 %v1421, %v1554
        %v1556 = vpop.f32.mrf.mxu0
        %1557 = vmatprep.mubr.f32.mxu0 %v1349
        %1558 = vmatmul.mubr.f32.gmra.mxu0 %v1348
        %v1559 = vpop.f32.mrf.mxu0
        %v1560 = vadd.f32 %v1421, %v1559
        %v1561 = vpop.f32.mrf.mxu0
        %1562 = vmatprep.mubr.f32.mxu0 %v1351
        %1563 = vmatmul.mubr.f32.gmra.mxu0 %v1350
        %v1564 = vpop.f32.mrf.mxu0
        %v1565 = vadd.f32 %v1421, %v1564
        %v1566 = vpop.f32.mrf.mxu0
        %1567 = vmatprep.mubr.f32.mxu0 %v1353
        %1568 = vmatmul.mubr.f32.gmra.mxu0 %v1352
        %v1569 = vpop.f32.mrf.mxu0
        %v1570 = vadd.f32 %v1421, %v1569
        %v1571 = vpop.f32.mrf.mxu0
        %1572 = vmatprep.mubr.f32.mxu0 %v1355
        %1573 = vmatmul.mubr.f32.gmra.mxu0 %v1354
        %v1574 = vpop.f32.mrf.mxu0
        %v1575 = vadd.f32 %v1421, %v1574
        %v1576 = vpop.f32.mrf.mxu0
        %1577 = vmatprep.mubr.f32.mxu0 %v1357
        %1578 = vmatmul.mubr.f32.gmra.mxu0 %v1356
        %v1579 = vpop.f32.mrf.mxu0
        %v1580 = vadd.f32 %v1421, %v1579
        %v1581 = vpop.f32.mrf.mxu0
        %1582 = vmatprep.mubr.f32.mxu0 %v1359
        %1583 = vmatmul.mubr.f32.gmra.mxu0 %v1358
        %v1584 = vpop.f32.mrf.mxu0
        %v1585 = vadd.f32 %v1421, %v1584
        %v1586 = vpop.f32.mrf.mxu0
        %1587 = vmatprep.mubr.f32.mxu0 %v1361
        %1588 = vmatmul.mubr.f32.gmra.mxu0 %v1360
        %v1589 = vpop.f32.mrf.mxu0
        %v1590 = vadd.f32 %v1421, %v1589
        %v1591 = vpop.f32.mrf.mxu0
        %1592 = vmatprep.mubr.f32.mxu0 %v1363
        %1593 = vmatmul.mubr.f32.gmra.mxu0 %v1362
        %v1594 = vpop.f32.mrf.mxu0
        %v1595 = vadd.f32 %v1421, %v1594
        %v1596 = vpop.f32.mrf.mxu0
        %1597 = vmatprep.mubr.f32.mxu0 %v1365
        %1598 = vmatmul.mubr.f32.gmra.mxu0 %v1364
        %v1599 = vpop.f32.mrf.mxu0
        %v1600 = vadd.f32 %v1421, %v1599
        %v1601 = vpop.f32.mrf.mxu0
        %1602 = vmatprep.mubr.f32.mxu0 %v1367
        %1603 = vmatmul.mubr.f32.gmra.mxu0 %v1366
        %v1604 = vpop.f32.mrf.mxu0
        %v1605 = vadd.f32 %v1421, %v1604
        %v1606 = vpop.f32.mrf.mxu0
        %1607 = vmatprep.mubr.f32.mxu0 %v1369
        %1608 = vmatmul.mubr.f32.gmra.mxu0 %v1368
        %v1609 = vpop.f32.mrf.mxu0
        %v1610 = vadd.f32 %v1421, %v1609
        %v1611 = vpop.f32.mrf.mxu0
        %1612 = vmatprep.mubr.f32.mxu0 %v1371
        %1613 = vmatmul.mubr.f32.gmra.mxu0 %v1370
        %v1614 = vpop.f32.mrf.mxu0
        %v1615 = vadd.f32 %v1421, %v1614
        %v1616 = vpop.f32.mrf.mxu0
        %1617 = vmatprep.mubr.f32.mxu0 %v1373
        %1618 = vmatmul.mubr.f32.gmra.mxu0 %v1372
        %v1619 = vpop.f32.mrf.mxu0
        %v1620 = vadd.f32 %v1421, %v1619
        %v1621 = vpop.f32.mrf.mxu0
        %1622 = vmatprep.mubr.f32.mxu0 %v1375
        %1623 = vmatmul.mubr.f32.gmra.mxu0 %v1374
        %v1624 = vpop.f32.mrf.mxu0
        %v1625 = vadd.f32 %v1421, %v1624
        %v1626 = vpop.f32.mrf.mxu0
        %1627 = vmatprep.mubr.f32.mxu0 %v1377
        %1628 = vmatmul.mubr.f32.gmra.mxu0 %v1376
        %v1629 = vpop.f32.mrf.mxu0
        %v1630 = vadd.f32 %v1421, %v1629
        %v1631 = vpop.f32.mrf.mxu0
        %1632 = vmatprep.mubr.f32.mxu0 %v1379
        %1633 = vmatmul.mubr.f32.gmra.mxu0 %v1378
        %v1634 = vpop.f32.mrf.mxu0
        %v1635 = vadd.f32 %v1421, %v1634
        %v1636 = vpop.f32.mrf.mxu0
        %1637 = vmatprep.mubr.f32.mxu0 %v1381
        %1638 = vmatmul.mubr.f32.gmra.mxu0 %v1380
        %v1639 = vpop.f32.mrf.mxu0
        %v1640 = vadd.f32 %v1421, %v1639
        %v1641 = vpop.f32.mrf.mxu0
        %1642 = vmatprep.mubr.f32.mxu0 %v1383
        %1643 = vmatmul.mubr.f32.gmra.mxu0 %v1382
        %v1644 = vpop.f32.mrf.mxu0
        %v1645 = vadd.f32 %v1421, %v1644
        %v1646 = vpop.f32.mrf.mxu0
        %1647 = vdwg.mxu0
        %1648 = vst [vmem:[%s379] sm:$0xff] %v1490
        %1649 = vst [vmem:[%s379 + $0x8] sm:$0xff] %v1495
        %1650 = vst [vmem:[%s379 + $0x10] sm:$0xff] %v1500
        %1651 = vst [vmem:[%s379 + $0x18] sm:$0xff] %v1505
        %1652 = vst [vmem:[%s379 + $0x20] sm:$0xff] %v1510
        %1653 = vst [vmem:[%s379 + $0x28] sm:$0xff] %v1515
        %1654 = vst [vmem:[%s379 + $0x30] sm:$0xff] %v1520
        %1655 = vst [vmem:[%s379 + $0x38] sm:$0xff] %v1525
        %1656 = vst [vmem:[%s379 + $0x40] sm:$0xff] %v1530
        %1657 = vst [vmem:[%s379 + $0x48] sm:$0xff] %v1535
        %1658 = vst [vmem:[%s379 + $0x50] sm:$0xff] %v1540
        %1659 = vst [vmem:[%s379 + $0x58] sm:$0xff] %v1545
        %1660 = vst [vmem:[%s379 + $0x60] sm:$0xff] %v1550
        %1661 = vst [vmem:[%s379 + $0x68] sm:$0xff] %v1555
        %1662 = vst [vmem:[%s379 + $0x70] sm:$0xff] %v1560
        %1663 = vst [vmem:[%s379 + $0x78] sm:$0xff] %v1565
        %1664 = vst [vmem:[%s379 + $0x80] sm:$0xff] %v1570
        %1665 = vst [vmem:[%s379 + $0x88] sm:$0xff] %v1575
        %1666 = vst [vmem:[%s379 + $0x90] sm:$0xff] %v1580
        %1667 = vst [vmem:[%s379 + $0x98] sm:$0xff] %v1585
        %1668 = vst [vmem:[%s379 + $0xa0] sm:$0xff] %v1590
        %1669 = vst [vmem:[%s379 + $0xa8] sm:$0xff] %v1595
        %1670 = vst [vmem:[%s379 + $0xb0] sm:$0xff] %v1600
        %1671 = vst [vmem:[%s379 + $0xb8] sm:$0xff] %v1605
        %1672 = vst [vmem:[%s379 + $0xc0] sm:$0xff] %v1610
        %1673 = vst [vmem:[%s379 + $0xc8] sm:$0xff] %v1615
        %1674 = vst [vmem:[%s379 + $0xd0] sm:$0xff] %v1620
        %1675 = vst [vmem:[%s379 + $0xd8] sm:$0xff] %v1625
        %1676 = vst [vmem:[%s379 + $0xe0] sm:$0xff] %v1630
        %1677 = vst [vmem:[%s379 + $0xe8] sm:$0xff] %v1635
        %1678 = vst [vmem:[%s379 + $0xf0] sm:$0xff] %v1640
        %1679 = vst [vmem:[%s379 + $0xf8] sm:$0xff] %v1645
        %s1680 = sand.u32 %s208, 1
        %s1681 = scalar_lea.sflag [#allocation4], %s1680
        %s1682 = sand.u32 %s208, 1
        %s1683 = smul.addr %s1682, 256
        %s1684 = scalar_lea.vmem [#allocation11], %s1683
        // Predicated region
        $region73: #{tpu_custom_call.1} parent=51 // pred_check
          %p1685 = pneg %p218
        $region74: #{tpu_custom_call.1} parent=51 // pred_check_branch
          %1687 = sbr.rel (%p1685) target = $region76
        $region75: #{tpu_custom_call.1} parent=51 // pred_region
          %s1689 = ssub.s32 4096, 4096
          %1690 = vsyncadd %s1681, %s1689
          %s1691 = smul.addr %s27, 32
          %s1692 = smul.addr %s1691, 128
          %s1693 = scalar_lea.hbm %s8, %s1692
          %s1694 = sshll.u32 %s1684, 4
          %s1695 = int_to_ptr.vmem [resolvable:$true] %s1694
          %1700 = dma.vmem_to_hbm [thread:$0]  %s1695, 4096, %s1693, %s1681, 128, 128, 8
        $region76: #{tpu_custom_call.1} parent=51 // pred_fallthru
          _
      $region52: #{tpu_custom_call.1} parent=5 // pred_fallthru
        _
      %p1701 = scmp.le.s32.totalorder 2, %s22
      // Predicated region
      $region77: #{tpu_custom_call.1} parent=5 // pred_check
        %p1702 = pneg %p1701
      $region78: #{tpu_custom_call.1} parent=5 // pred_check_branch
        %1704 = sbr.rel (%p1702) target = $region80
      $region79: #{tpu_custom_call.1} parent=5 // pred_region
        %s1705 = ssub.s32 %s22, 2
        // Predicated region
        $region81: #{tpu_custom_call.1} parent=79 // pred_check
          %p1706 = pneg %p224
        $region82: #{tpu_custom_call.1} parent=79 // pred_check_branch
          %1708 = sbr.rel (%p1706) target = $region84
        $region83: #{tpu_custom_call.1} parent=79 // pred_region
          %s1709 = sand.u32 %s209, 1
          %s1710 = scalar_lea.sflag [#allocation4], %s1709
          %s1711 = sand.u32 %s209, 1
          %s1712 = smul.addr %s1711, 256
          %s1713 = scalar_lea.vmem [#allocation11], %s1712
          %1714 = dma.done %s1710, 4096
        $region84: #{tpu_custom_call.1} parent=79 // pred_fallthru
          _
      $region80: #{tpu_custom_call.1} parent=5 // pred_fallthru
        _
    $region6: #{tpu_custom_call.1} parent=1 // loop_footer
      %s26 = sadd.s32 1, %s22
    $region7: #{tpu_custom_call.1} parent=1 // loop_footer_branch
      %21 = sbr.rel target = $region3
    $region8: #{tpu_custom_call.1} parent=1 // loop_exit
      _
    %1715 = vsyncpa [#allocation3], 1
    %s1716 = scalar_lea.sflag [#allocation3], 1
    %1717 = vsyncpa %s1716, 1
    %1718 = vsyncpa [#allocation6], 1
    %1719 = vsyncpa [#allocation9], 1
    %1720 = vsyncpa [#allocation4], 1
    %s1721 = scalar_lea.sflag [#allocation4], 1
    %1722 = vsyncpa %s1721, 1

</llo_original>
